<compile_context>
chip_gen: v7x
topology: tpu7x:2x2x1
jax: 0.10.0
libtpu: 0.0.40
codegen_flags: <defaults>
</compile_context>

<pallas_src>
import jax
import jax.numpy as jnp
from jax.experimental import pallas as pl
from jax.experimental.pallas import tpu as pltpu

N_EMBED = 384        # n_embed from the module
BLOCK_SIZE = 256     # block_size (max T); causal mask generated in-kernel via iota


def head_kernel(x_ref, w_ref, o_ref):
    # x_ref: (Bb, T, C) activations; w_ref: (C, 3H) fused [q|k|v] weights with the
    # attention scale pre-folded into the q columns.
    Bb, T, C = x_ref.shape
    H = w_ref.shape[1] // 3

    x = x_ref[...]                                  # (Bb, T, C)  input dtype
    w = w_ref[...]                                  # (C, 3H)     input dtype

    # Single fused QKV projection, f32 accumulation on the MXU.
    qkv = jnp.dot(x.reshape(Bb * T, C), w,
                  preferred_element_type=jnp.float32)       # (Bb*T, 3H) f32
    qkv = qkv.reshape(Bb, T, 3 * H)

    q = qkv[:, :, 0 * H:1 * H].astype(x.dtype)              # (Bb, T, H), already scaled
    k = qkv[:, :, 1 * H:2 * H].astype(x.dtype)              # (Bb, T, H)
    v = qkv[:, :, 2 * H:3 * H].astype(x.dtype)              # (Bb, T, H)

    # Batched q @ k^T without materializing a transpose of k; f32 scores.
    s = jnp.einsum('bqh,bkh->bqk', q, k,
                   preferred_element_type=jnp.float32)      # (Bb, T, T) f32

    # Causal mask (tril): keep where key index <= query index.
    row = jax.lax.broadcasted_iota(jnp.int32, (T, T), 0)
    col = jax.lax.broadcasted_iota(jnp.int32, (T, T), 1)
    s = jnp.where((col <= row)[None, :, :], s, -jnp.inf)

    # Numerically stable softmax numerator in f32. The diagonal is never masked,
    # so every row has a finite max and a nonzero sum.
    s = s - jnp.max(s, axis=-1, keepdims=True)
    p = jnp.exp(s)
    inv = pl.reciprocal(jnp.sum(p, axis=-1, keepdims=True), approx=True)  # (Bb, T, 1)

    # Unnormalized p @ v on the MXU, then fold the softmax denominator into the
    # (T, H) result (cheaper than normalizing the (T, T) probabilities).
    out = jnp.einsum('bqk,bkh->bqh', p.astype(x.dtype), v,
                     preferred_element_type=jnp.float32)    # (Bb, T, H) f32
    o_ref[...] = (out * inv).astype(o_ref.dtype)


def _choose_block_b(B, max_block_b=8):
    """Largest divisor of B that caps per-step VMEM (<=8 batch elems at T=256 f32)
    and keeps the grid >= 2 steps so both v7x TensorCores stay busy."""
    best = 1
    for bb in range(1, min(B, max_block_b) + 1):
        if B % bb == 0 and (B // bb >= 2 or B == 1):
            best = bb
    return best


def head_forward(x, wk, wq, wv, *, block_b=None):
    """x: (B, T, C); wk/wq/wv in PyTorch nn.Linear layout (head_size, n_embed).

    Compute dtype follows x.dtype (f32 for exact module semantics, bf16 for the
    fast path); every matmul accumulates in f32 and the softmax is done in f32.
    """
    B, T, C = x.shape
    H = wk.shape[0]
    assert wk.shape == (H, C) and wq.shape == (H, C) and wv.shape == (H, C)
    assert T <= BLOCK_SIZE

    # Fuse into a single (C, 3H) weight, ordered [q | k | v], in the activation
    # dtype, with 1/sqrt(C) folded into the q columns (one-time tiny wrapper op).
    scale = C ** (-0.5)
    w_qkv = jnp.concatenate([wq.T * scale, wk.T, wv.T], axis=1).astype(x.dtype)

    if block_b is None:
        block_b = _choose_block_b(B)
    assert B % block_b == 0
    grid = (B // block_b,)

    grid_spec = pltpu.PrefetchScalarGridSpec(
        num_scalar_prefetch=0,
        grid=grid,
        in_specs=[
            pl.BlockSpec((block_b, T, C), lambda b: (b, 0, 0)),
            pl.BlockSpec((C, 3 * H), lambda b: (0, 0)),   # constant block: stays resident
        ],
        out_specs=pl.BlockSpec((block_b, T, H), lambda b: (b, 0, 0)),
    )
    return pl.pallas_call(
        head_kernel,
        out_shape=jax.ShapeDtypeStruct((B, T, H), x.dtype),
        grid_spec=grid_spec,
        compiler_params=pltpu.CompilerParams(
            dimension_semantics=("parallel",),
        ),
    )(x, w_qkv)


def reference_forward(x, wk, wq, wv):
    """Pure-JAX f32 reference matching the PyTorch forward (PyTorch weight layout)."""
    B, T, C = x.shape
    k = x @ wk.T
    q = x @ wq.T
    v = x @ wv.T
    wei = (q @ jnp.swapaxes(k, -2, -1)) * C ** (-0.5)
    tril = jnp.tril(jnp.ones((T, T)))
    wei = jnp.where(tril == 0, -jnp.inf, wei)
    wei = jax.nn.softmax(wei, axis=-1)
    return wei @ v


# TODO(synk): the 64-lane output remains a masked (vst.msk) store; a fully
# lane-dense output would require widening the kernel to all heads
# (MultiHeadAttention), which is outside this single-Head module's scope.

if __name__ == "__main__":
    key = jax.random.PRNGKey(0)
    B, T, head_size = 8, 64, 64     # small shapes; C fixed by the module
    C = N_EMBED

    kx, kk, kq, kv = jax.random.split(key, 4)
    x = jax.random.normal(kx, (B, T, C), dtype=jnp.float32)
    # PyTorch nn.Linear weights are (head_size, n_embed).
    bound = 1.0 / (C ** 0.5)
    wk = jax.random.uniform(kk, (head_size, C), minval=-bound, maxval=bound, dtype=jnp.float32)
    wq = jax.random.uniform(kq, (head_size, C), minval=-bound, maxval=bound, dtype=jnp.float32)
    wv = jax.random.uniform(kv, (head_size, C), minval=-bound, maxval=bound, dtype=jnp.float32)

    ref = reference_forward(x, wk, wq, wv)

    # f32 path: matches the module's numerics.
    out_f32 = jax.block_until_ready(head_forward(x, wk, wq, wv))
    assert out_f32.shape == (B, T, head_size)
    assert jnp.allclose(out_f32, ref, atol=5e-3, rtol=5e-3)

    # bf16 fast path: bf16 MXU inputs, f32 accumulation + f32 softmax.
    out_bf16 = jax.block_until_ready(head_forward(x.astype(jnp.bfloat16), wk, wq, wv))
    assert out_bf16.dtype == jnp.bfloat16
    assert jnp.allclose(out_bf16.astype(jnp.float32), ref, atol=3e-2, rtol=3e-2)

    print("KERNEL_OK")
</pallas_src>

<mosaic_0001>
module attributes {stable_mosaic.version = 11 : i64} {
  func.func @head_kernel(%arg0: i32, %arg1: memref<4x64x384xf32, #tpu.memory_space<vmem>>, %arg2: memref<384x192xf32, #tpu.memory_space<vmem>>, %arg3: memref<4x64x64xf32, #tpu.memory_space<vmem>>) attributes {dimension_semantics = [#tpu.dimension_semantics<parallel>], iteration_bounds = array<i64: 2>, scalar_prefetch = 0 : i64, scratch_operands = 0 : i64, tpu.core_type = #tpu.core_type<tc>, window_params = [{transform_indices = @transform_0, window_bounds = array<i64: 4, 64, 384>}, {pipeline_mode = #tpu.pipeline_mode<synchronous>, transform_indices = @transform_1, window_bounds = array<i64: 384, 192>}, {transform_indices = @transform_2, window_bounds = array<i64: 4, 64, 64>}]} {
    %c0 = arith.constant 0 : index
    %c0_0 = arith.constant 0 : index
    %c0_1 = arith.constant 0 : index
    %0 = vector.load %arg1[%c0, %c0_0, %c0_1] : memref<4x64x384xf32, #tpu.memory_space<vmem>>, vector<4x64x384xf32>
    %c0_2 = arith.constant 0 : index
    %c0_3 = arith.constant 0 : index
    %1 = vector.load %arg2[%c0_2, %c0_3] : memref<384x192xf32, #tpu.memory_space<vmem>>, vector<384x192xf32>
    %2 = vector.shape_cast %0 : vector<4x64x384xf32> to vector<256x384xf32>
    %cst = arith.constant dense<0.000000e+00> : vector<256x192xf32>
    %3 = tpu.matmul %2, %1, %cst {dimension_numbers = #tpu.dot_dimension_numbers<[1], [0], [0], [1], [0, 0, 1, 1], [], []>} : vector<256x384xf32>, vector<384x192xf32>, vector<256x192xf32> -> vector<256x192xf32>
    %4 = vector.shape_cast %3 : vector<256x192xf32> to vector<4x64x192xf32>
    %5 = vector.extract_strided_slice %4 {offsets = [0, 0, 0], sizes = [4, 64, 64], strides = [1, 1, 1]} : vector<4x64x192xf32> to vector<4x64x64xf32>
    %6 = vector.extract_strided_slice %4 {offsets = [0, 0, 64], sizes = [4, 64, 64], strides = [1, 1, 1]} : vector<4x64x192xf32> to vector<4x64x64xf32>
    %7 = vector.extract_strided_slice %4 {offsets = [0, 0, 128], sizes = [4, 64, 64], strides = [1, 1, 1]} : vector<4x64x192xf32> to vector<4x64x64xf32>
    "tpu.trace_start"() <{level = 10 : i32, message = "bqh,bkh->bqk"}> : () -> ()
    %cst_4 = arith.constant dense<0.000000e+00> : vector<4x64x64xf32>
    %8 = tpu.matmul %5, %6, %cst_4 {dimension_numbers = #tpu.dot_dimension_numbers<[2], [2], [1], [1], [0, 0, 0, 1, 1, 1], [0], [0]>} : vector<4x64x64xf32>, vector<4x64x64xf32>, vector<4x64x64xf32> -> vector<4x64x64xf32>
    "tpu.trace_stop"() : () -> ()
    %9 = tpu.iota {dimensions = array<i32: 0>} : vector<64x64xi32>
    %10 = tpu.iota {dimensions = array<i32: 1>} : vector<64x64xi32>
    %11 = arith.cmpi sle, %10, %9 : vector<64x64xi32>
    %12 = vector.shape_cast %11 : vector<64x64xi1> to vector<1x64x64xi1>
    %cst_5 = arith.constant 0xFF800000 : f32
    %13 = vector.shape_cast %12 : vector<1x64x64xi1> to vector<1x64x64xi1>
    %14 = vector.broadcast %13 : vector<1x64x64xi1> to vector<4x64x64xi1>
    %15 = vector.broadcast %cst_5 : f32 to vector<4x64x64xf32>
    %16 = arith.select %14, %8, %15 : vector<4x64x64xi1>, vector<4x64x64xf32>
    %cst_6 = arith.constant dense<0xFF800000> : vector<4x64xf32>
    %17 = vector.multi_reduction <maximumf>, %16, %cst_6 [2] : vector<4x64x64xf32> to vector<4x64xf32>
    %18 = vector.shape_cast %17 : vector<4x64xf32> to vector<4x64x1xf32>
    %19 = vector.broadcast %18 : vector<4x64x1xf32> to vector<4x64x64xf32>
    %20 = arith.subf %16, %19 : vector<4x64x64xf32>
    %21 = math.exp %20 : vector<4x64x64xf32>
    %cst_7 = arith.constant dense<0.000000e+00> : vector<4x64xf32>
    %22 = vector.multi_reduction <add>, %21, %cst_7 [2] : vector<4x64x64xf32> to vector<4x64xf32>
    %23 = vector.shape_cast %22 : vector<4x64xf32> to vector<4x64x1xf32>
    %24 = tpu.reciprocal %23 {approx = true} : vector<4x64x1xf32> -> vector<4x64x1xf32>
    "tpu.trace_start"() <{level = 10 : i32, message = "bqk,bkh->bqh"}> : () -> ()
    %cst_8 = arith.constant dense<0.000000e+00> : vector<4x64x64xf32>
    %25 = tpu.matmul %21, %7, %cst_8 {dimension_numbers = #tpu.dot_dimension_numbers<[2], [1], [1], [2], [0, 0, 0, 1, 1, 2], [0], [0]>} : vector<4x64x64xf32>, vector<4x64x64xf32>, vector<4x64x64xf32> -> vector<4x64x64xf32>
    "tpu.trace_stop"() : () -> ()
    %26 = vector.broadcast %24 : vector<4x64x1xf32> to vector<4x64x64xf32>
    %27 = arith.mulf %25, %26 : vector<4x64x64xf32>
    %c0_9 = arith.constant 0 : index
    %c0_10 = arith.constant 0 : index
    %c0_11 = arith.constant 0 : index
    %28 = vector.load %arg3[%c0_9, %c0_10, %c0_11] : memref<4x64x64xf32, #tpu.memory_space<vmem>>, vector<4x64x64xf32>
    tpu.vector_store %arg3[%c0_9, %c0_10, %c0_11], %27 {strides = array<i32>} : memref<4x64x64xf32, #tpu.memory_space<vmem>>, vector<4x64x64xf32>,
    return
  }
  func.func @transform_0(%arg0: i32) -> (i32, i32, i32) {
    %c0_i32 = arith.constant 0 : i32
    %c0_i32_0 = arith.constant 0 : i32
    %c0_i32_1 = arith.constant 0 : i32
    return %arg0, %c0_i32, %c0_i32_0 : i32, i32, i32
  }
  func.func @transform_1(%arg0: i32) -> (i32, i32) {
    %c0_i32 = arith.constant 0 : i32
    %c0_i32_0 = arith.constant 0 : i32
    %c0_i32_1 = arith.constant 0 : i32
    return %c0_i32, %c0_i32_0 : i32, i32
  }
  func.func @transform_2(%arg0: i32) -> (i32, i32, i32) {
    %c0_i32 = arith.constant 0 : i32
    %c0_i32_0 = arith.constant 0 : i32
    %c0_i32_1 = arith.constant 0 : i32
    return %arg0, %c0_i32, %c0_i32_0 : i32, i32, i32
  }
}

</mosaic_0001>

<llo_original>
// kernel: tpu_custom_call.1
$region0: #{tpu_custom_call.1}
  #allocation0 [shape = 'u32[]', space=smem, size = 0x4, offset = 0x4, fixed_abs, tag = 'smem constant byte address 0x4 - core index']
  #allocation1 [shape = 'u32[144,128]{1,0:T(1,128)}', space=vmem, size = 0x12000, scoped, tag = 'internal scratch']
  %s0 = inlined_call_operand.hbm [shape: f32[8,64,384], index: 0, kind: input, shape index: {}]
  %s1 = inlined_call_operand.vmem [shape: f32[384,192], index: 1, kind: input, shape index: {}]
  %s2 = inlined_call_operand.hbm [shape: f32[8,64,64], index: 2, kind: output, shape index: {}]
  %s3 = sld [smem:[#allocation0]]
  $region45: #{tpu_custom_call.1} parent=0
    _
  %s5 = ssub.s32 1, %s3
  %s6 = scalar_select 0, %s5, %s3
  $region1: #{tpu_custom_call.1} parent=0
    #allocation2 [shape = 'u8[786432]{0}', space=vmem, size = 0xc0000, scoped, tag = 'input window, operand 0']
    #allocation3 [shape = 's32[2]{0}', space=sflag, size = 0x8, scoped, tag = 'scoped memory for tpu_custom_call.1']
    #allocation4 [shape = 's32[2]{0}', space=sflag, size = 0x8, scoped, tag = 'scoped memory for tpu_custom_call.1']
    #allocation5 [shape = 'u8[262144]{0}', space=vmem, size = 0x40000, scoped, tag = 'output window, operand 0']
    %7 = vsyncpa [#allocation3], 0
    %s8 = scalar_lea.sflag [#allocation3], 1
    %9 = vsyncpa %s8, 0
    %10 = vsyncpa [#allocation4], 0
    %s11 = scalar_lea.sflag [#allocation4], 1
    %12 = vsyncpa %s11, 0
    loop: start=0, step=1, limit=4
    $region2: #{tpu_custom_call.1} parent=1 // loop_pre_header
      _
    $region3: #{tpu_custom_call.1} parent=1 // loop_header
      %s14 = sphi 0, %s18
      %p15 = scmp.ge.s32.totalorder %s14, 4
      %s24 = sphi 0, %s26
      %s27 = sphi 0, %s24
      %s28 = sphi 0, %s27
      %s44 = sphi 0, %s28
      %s48 = sphi 0, %s48
      %s50 = sphi 0, %s48
      %s51 = sphi 0, %s50
      %s65 = sphi 0, %s51
      %s71 = sphi 0, %s73
      %s74 = sphi 0, %s71
      %s75 = sphi 0, %s74
      %s91 = sphi 0, %s75
    $region4: #{tpu_custom_call.1} parent=1 // loop_header_branch
      %17 = sbr.rel (%p15) target = $region8
    $region5: #{tpu_custom_call.1} parent=1 // loop_body
      %s19 = ssub.s32 %s14, 1
      %s20 = ssub.s32 %s14, 2
      %s21 = sadd.s32 %s14, 1
      %s22 = ssub.s32 %s14, %s21
      %p23 = scmp.eq.s32.totalorder %s22, 0
      %s25 = sadd.s32 %s24, 1
      %s26 = scalar_select %p23, %s24, %s25
      %p29 = pneg %p23
      %p30 = scmp.eq.s32.totalorder %s14, 1
      %p31 = por %p29, %p30
      %p32 = scmp.ne.s32.totalorder %s24, %s27
      %p33 = scmp.eq.s32.totalorder %s14, 0
      %p34 = por %p32, %p33
      %p35 = scmp.ne.s32.totalorder %s24, %s27
      %p36 = scmp.eq.s32.totalorder %s19, 1
      %p37 = por %p35, %p36
      %p38 = scmp.ne.s32.totalorder %s27, %s28
      %p39 = scmp.eq.s32.totalorder %s19, 0
      %p40 = por %p38, %p39
      %p41 = scmp.ne.s32.totalorder %s27, %s28
      %p42 = scmp.eq.s32.totalorder %s20, 1
      %p43 = por %p41, %p42
      %p45 = scmp.ne.s32.totalorder %s28, %s44
      %p46 = scmp.eq.s32.totalorder %s20, 0
      %p47 = por %p45, %p46
      %s49 = sadd.s32 %s48, 1
      %p52 = scmp.eq.s32.totalorder %s14, 1
      %p53 = scmp.ne.s32.totalorder %s48, %s50
      %p54 = scmp.eq.s32.totalorder %s14, 0
      %p55 = por %p53, %p54
      %p56 = scmp.ne.s32.totalorder %s48, %s50
      %p57 = scmp.eq.s32.totalorder %s19, 1
      %p58 = por %p56, %p57
      %p59 = scmp.ne.s32.totalorder %s50, %s51
      %p60 = scmp.eq.s32.totalorder %s19, 0
      %p61 = por %p59, %p60
      %p62 = scmp.ne.s32.totalorder %s50, %s51
      %p63 = scmp.eq.s32.totalorder %s20, 1
      %p64 = por %p62, %p63
      %p66 = scmp.ne.s32.totalorder %s51, %s65
      %p67 = scmp.eq.s32.totalorder %s20, 0
      %p68 = por %p66, %p67
      %s69 = ssub.s32 %s14, %s21
      %p70 = scmp.eq.s32.totalorder %s69, 0
      %s72 = sadd.s32 %s71, 1
      %s73 = scalar_select %p70, %s71, %s72
      %p76 = pneg %p70
      %p77 = scmp.eq.s32.totalorder %s14, 1
      %p78 = por %p76, %p77
      %p79 = scmp.ne.s32.totalorder %s71, %s74
      %p80 = scmp.eq.s32.totalorder %s14, 0
      %p81 = por %p79, %p80
      %p82 = scmp.ne.s32.totalorder %s71, %s74
      %p83 = scmp.eq.s32.totalorder %s19, 1
      %p84 = por %p82, %p83
      %p85 = scmp.ne.s32.totalorder %s74, %s75
      %p86 = scmp.eq.s32.totalorder %s19, 0
      %p87 = por %p85, %p86
      %p88 = scmp.ne.s32.totalorder %s74, %s75
      %p89 = scmp.eq.s32.totalorder %s20, 1
      %p90 = por %p88, %p89
      %p92 = scmp.ne.s32.totalorder %s75, %s91
      %p93 = scmp.eq.s32.totalorder %s20, 0
      %p94 = por %p92, %p93
      %p95 = scmp.le.s32.totalorder 1, %s14
      %p96 = scmp.lt.s32.totalorder %s14, 3
      %p97 = pnand %p95, %p96
      %p98 = pneg %p97
      // Predicated region
      $region9: #{tpu_custom_call.1} parent=5 // pred_check
        _
      $region10: #{tpu_custom_call.1} parent=5 // pred_check_branch
        %100 = sbr.rel (%p97) target = $region12
      $region11: #{tpu_custom_call.1} parent=5 // pred_region
        %s101 = ssub.s32 %s14, 1
        // Predicated region
        $region13: #{tpu_custom_call.1} parent=11 // pred_check
          %p102 = pneg %p61
        $region14: #{tpu_custom_call.1} parent=11 // pred_check_branch
          %104 = sbr.rel (%p102) target = $region16
        $region15: #{tpu_custom_call.1} parent=11 // pred_region
          _
        $region16: #{tpu_custom_call.1} parent=11 // pred_fallthru
          _
      $region12: #{tpu_custom_call.1} parent=5 // pred_fallthru
        _
      %p105 = scmp.lt.s32.totalorder %s14, 2
      // Predicated region
      $region17: #{tpu_custom_call.1} parent=5 // pred_check
        %p106 = pneg %p105
      $region18: #{tpu_custom_call.1} parent=5 // pred_check_branch
        %108 = sbr.rel (%p106) target = $region20
      $region19: #{tpu_custom_call.1} parent=5 // pred_region
        // Predicated region
        $region21: #{tpu_custom_call.1} parent=19 // pred_check
          %p109 = pneg %p34
        $region22: #{tpu_custom_call.1} parent=19 // pred_check_branch
          %111 = sbr.rel (%p109) target = $region24
        $region23: #{tpu_custom_call.1} parent=19 // pred_region
          %s112 = sand.u32 %s24, 1
          %s113 = scalar_lea.sflag [#allocation3], %s112
          %s114 = sand.u32 %s24, 1
          %s115 = smul.addr %s114, 768
          %s116 = scalar_lea.vmem [#allocation2], %s115
          %s117 = smul.u32 4, %s14
          %s119 = ssub.s32 12288, 12288
          %120 = vsyncadd %s113, %s119
          %s121 = smul.addr %s117, 24
          %s122 = smul.addr %s121, 128
          %s123 = scalar_lea.hbm %s0, %s122
          %s124 = sshll.u32 %s116, 4
          %s125 = int_to_ptr.vmem [resolvable:$true] %s124
          %130 = dma.hbm_to_vmem [thread:$0]  %s123, 12288, %s125, %s113, 384, 384, 24
        $region24: #{tpu_custom_call.1} parent=19 // pred_fallthru
          _
      $region20: #{tpu_custom_call.1} parent=5 // pred_fallthru
        _
      %p131 = scmp.le.s32.totalorder 1, %s14
      %p132 = scmp.lt.s32.totalorder %s14, 3
      %p133 = pnand %p131, %p132
      %p134 = pneg %p133
      // Predicated region
      $region25: #{tpu_custom_call.1} parent=5 // pred_check
        _
      $region26: #{tpu_custom_call.1} parent=5 // pred_check_branch
        %136 = sbr.rel (%p133) target = $region28
      $region27: #{tpu_custom_call.1} parent=5 // pred_region
        %s137 = ssub.s32 %s14, 1
        %s138 = sand.u32 %s27, 1
        %s139 = scalar_lea.sflag [#allocation3], %s138
        %s140 = sand.u32 %s27, 1
        %s141 = smul.addr %s140, 768
        %s142 = scalar_lea.vmem [#allocation2], %s141
        // Predicated region
        $region29: #{tpu_custom_call.1} parent=27 // pred_check
          %p143 = pneg %p40
        $region30: #{tpu_custom_call.1} parent=27 // pred_check_branch
          %145 = sbr.rel (%p143) target = $region32
        $region31: #{tpu_custom_call.1} parent=27 // pred_region
          %146 = dma.done %s139, 12288
        $region32: #{tpu_custom_call.1} parent=27 // pred_fallthru
          _
        %s147 = sand.u32 %s27, 1
        %s148 = scalar_lea.sflag [#allocation3], %s147
        %s149 = sand.u32 %s27, 1
        %s150 = smul.addr %s149, 768
        %s151 = scalar_lea.vmem [#allocation2], %s150
        %p152 = pneg %p40
        %p153 = pneg %p37
        %p154 = pneg %p61
        %p155 = pneg %p58
        %p156 = pneg %p87
        %p157 = pneg %p84
        %s158 = sand.u32 %s74, 1
        %s159 = scalar_lea.sflag [#allocation4], %s158
        %s160 = sand.u32 %s74, 1
        %s161 = smul.addr %s160, 256
        %s162 = scalar_lea.vmem [#allocation5], %s161
        %s163 = smul.u32 4, %s19
        %s164 = smul.u32 4, %s19
        %v165 = vld [vmem:[%s142] sm:$0xff]
        %v166 = vld [vmem:[%s142 + $0x8] sm:$0xff]
        %v167 = vld [vmem:[%s142 + $0x10] sm:$0xff]
        %v168 = vld [vmem:[%s142 + $0x18] sm:$0xff]
        %v169 = vld [vmem:[%s142 + $0x20] sm:$0xff]
        %v170 = vld [vmem:[%s142 + $0x28] sm:$0xff]
        %v171 = vld [vmem:[%s142 + $0x30] sm:$0xff]
        %v172 = vld [vmem:[%s142 + $0x38] sm:$0xff]
        %v173 = vld [vmem:[%s142 + $0x40] sm:$0xff]
        %v174 = vld [vmem:[%s142 + $0x48] sm:$0xff]
        %v175 = vld [vmem:[%s142 + $0x50] sm:$0xff]
        %v176 = vld [vmem:[%s142 + $0x58] sm:$0xff]
        %v177 = vld [vmem:[%s142 + $0x60] sm:$0xff]
        %v178 = vld [vmem:[%s142 + $0x68] sm:$0xff]
        %v179 = vld [vmem:[%s142 + $0x70] sm:$0xff]
        %v180 = vld [vmem:[%s142 + $0x78] sm:$0xff]
        %v181 = vld [vmem:[%s142 + $0x80] sm:$0xff]
        %v182 = vld [vmem:[%s142 + $0x88] sm:$0xff]
        %v183 = vld [vmem:[%s142 + $0x90] sm:$0xff]
        %v184 = vld [vmem:[%s142 + $0x98] sm:$0xff]
        %v185 = vld [vmem:[%s142 + $0xa0] sm:$0xff]
        %v186 = vld [vmem:[%s142 + $0xa8] sm:$0xff]
        %v187 = vld [vmem:[%s142 + $0xb0] sm:$0xff]
        %v188 = vld [vmem:[%s142 + $0xb8] sm:$0xff]
        %v189 = vld [vmem:[%s142 + $0xc0] sm:$0xff]
        %v190 = vld [vmem:[%s142 + $0xc8] sm:$0xff]
        %v191 = vld [vmem:[%s142 + $0xd0] sm:$0xff]
        %v192 = vld [vmem:[%s142 + $0xd8] sm:$0xff]
        %v193 = vld [vmem:[%s142 + $0xe0] sm:$0xff]
        %v194 = vld [vmem:[%s142 + $0xe8] sm:$0xff]
        %v195 = vld [vmem:[%s142 + $0xf0] sm:$0xff]
        %v196 = vld [vmem:[%s142 + $0xf8] sm:$0xff]
        %v197 = vld [vmem:[%s142 + $0x100] sm:$0xff]
        %v198 = vld [vmem:[%s142 + $0x108] sm:$0xff]
        %v199 = vld [vmem:[%s142 + $0x110] sm:$0xff]
        %v200 = vld [vmem:[%s142 + $0x118] sm:$0xff]
        %v201 = vld [vmem:[%s142 + $0x120] sm:$0xff]
        %v202 = vld [vmem:[%s142 + $0x128] sm:$0xff]
        %v203 = vld [vmem:[%s142 + $0x130] sm:$0xff]
        %v204 = vld [vmem:[%s142 + $0x138] sm:$0xff]
        %v205 = vld [vmem:[%s142 + $0x140] sm:$0xff]
        %v206 = vld [vmem:[%s142 + $0x148] sm:$0xff]
        %v207 = vld [vmem:[%s142 + $0x150] sm:$0xff]
        %v208 = vld [vmem:[%s142 + $0x158] sm:$0xff]
        %v209 = vld [vmem:[%s142 + $0x160] sm:$0xff]
        %v210 = vld [vmem:[%s142 + $0x168] sm:$0xff]
        %v211 = vld [vmem:[%s142 + $0x170] sm:$0xff]
        %v212 = vld [vmem:[%s142 + $0x178] sm:$0xff]
        %v213 = vld [vmem:[%s142 + $0x180] sm:$0xff]
        %v214 = vld [vmem:[%s142 + $0x188] sm:$0xff]
        %v215 = vld [vmem:[%s142 + $0x190] sm:$0xff]
        %v216 = vld [vmem:[%s142 + $0x198] sm:$0xff]
        %v217 = vld [vmem:[%s142 + $0x1a0] sm:$0xff]
        %v218 = vld [vmem:[%s142 + $0x1a8] sm:$0xff]
        %v219 = vld [vmem:[%s142 + $0x1b0] sm:$0xff]
        %v220 = vld [vmem:[%s142 + $0x1b8] sm:$0xff]
        %v221 = vld [vmem:[%s142 + $0x1c0] sm:$0xff]
        %v222 = vld [vmem:[%s142 + $0x1c8] sm:$0xff]
        %v223 = vld [vmem:[%s142 + $0x1d0] sm:$0xff]
        %v224 = vld [vmem:[%s142 + $0x1d8] sm:$0xff]
        %v225 = vld [vmem:[%s142 + $0x1e0] sm:$0xff]
        %v226 = vld [vmem:[%s142 + $0x1e8] sm:$0xff]
        %v227 = vld [vmem:[%s142 + $0x1f0] sm:$0xff]
        %v228 = vld [vmem:[%s142 + $0x1f8] sm:$0xff]
        %v229 = vld [vmem:[%s142 + $0x200] sm:$0xff]
        %v230 = vld [vmem:[%s142 + $0x208] sm:$0xff]
        %v231 = vld [vmem:[%s142 + $0x210] sm:$0xff]
        %v232 = vld [vmem:[%s142 + $0x218] sm:$0xff]
        %v233 = vld [vmem:[%s142 + $0x220] sm:$0xff]
        %v234 = vld [vmem:[%s142 + $0x228] sm:$0xff]
        %v235 = vld [vmem:[%s142 + $0x230] sm:$0xff]
        %v236 = vld [vmem:[%s142 + $0x238] sm:$0xff]
        %v237 = vld [vmem:[%s142 + $0x240] sm:$0xff]
        %v238 = vld [vmem:[%s142 + $0x248] sm:$0xff]
        %v239 = vld [vmem:[%s142 + $0x250] sm:$0xff]
        %v240 = vld [vmem:[%s142 + $0x258] sm:$0xff]
        %v241 = vld [vmem:[%s142 + $0x260] sm:$0xff]
        %v242 = vld [vmem:[%s142 + $0x268] sm:$0xff]
        %v243 = vld [vmem:[%s142 + $0x270] sm:$0xff]
        %v244 = vld [vmem:[%s142 + $0x278] sm:$0xff]
        %v245 = vld [vmem:[%s142 + $0x280] sm:$0xff]
        %v246 = vld [vmem:[%s142 + $0x288] sm:$0xff]
        %v247 = vld [vmem:[%s142 + $0x290] sm:$0xff]
        %v248 = vld [vmem:[%s142 + $0x298] sm:$0xff]
        %v249 = vld [vmem:[%s142 + $0x2a0] sm:$0xff]
        %v250 = vld [vmem:[%s142 + $0x2a8] sm:$0xff]
        %v251 = vld [vmem:[%s142 + $0x2b0] sm:$0xff]
        %v252 = vld [vmem:[%s142 + $0x2b8] sm:$0xff]
        %v253 = vld [vmem:[%s142 + $0x2c0] sm:$0xff]
        %v254 = vld [vmem:[%s142 + $0x2c8] sm:$0xff]
        %v255 = vld [vmem:[%s142 + $0x2d0] sm:$0xff]
        %v256 = vld [vmem:[%s142 + $0x2d8] sm:$0xff]
        %v257 = vld [vmem:[%s142 + $0x2e0] sm:$0xff]
        %v258 = vld [vmem:[%s142 + $0x2e8] sm:$0xff]
        %v259 = vld [vmem:[%s142 + $0x2f0] sm:$0xff]
        %v260 = vld [vmem:[%s142 + $0x2f8] sm:$0xff]
        %v261 = vld [vmem:[%s1] sm:$0xff]
        %v262 = vld [vmem:[%s1 + $0x8] sm:$0xff]
        %v263 = vld [vmem:[%s1 + $0x10] sm:$0xff]
        %v264 = vld [vmem:[%s1 + $0x18] sm:$0xff]
        %v265 = vld [vmem:[%s1 + $0x20] sm:$0xff]
        %v266 = vld [vmem:[%s1 + $0x28] sm:$0xff]
        %v267 = vld [vmem:[%s1 + $0x30] sm:$0xff]
        %v268 = vld [vmem:[%s1 + $0x38] sm:$0xff]
        %v269 = vld [vmem:[%s1 + $0x40] sm:$0xff]
        %v270 = vld [vmem:[%s1 + $0x48] sm:$0xff]
        %v271 = vld [vmem:[%s1 + $0x50] sm:$0xff]
        %v272 = vld [vmem:[%s1 + $0x58] sm:$0xff]
        %v273 = vld [vmem:[%s1 + $0x60] sm:$0xff]
        %v274 = vld [vmem:[%s1 + $0x68] sm:$0xff]
        %v275 = vld [vmem:[%s1 + $0x70] sm:$0xff]
        %v276 = vld [vmem:[%s1 + $0x78] sm:$0xff]
        %v277 = vld [vmem:[%s1 + $0x80] sm:$0xff]
        %v278 = vld [vmem:[%s1 + $0x88] sm:$0xff]
        %v279 = vld [vmem:[%s1 + $0x90] sm:$0xff]
        %v280 = vld [vmem:[%s1 + $0x98] sm:$0xff]
        %v281 = vld [vmem:[%s1 + $0xa0] sm:$0xff]
        %v282 = vld [vmem:[%s1 + $0xa8] sm:$0xff]
        %v283 = vld [vmem:[%s1 + $0xb0] sm:$0xff]
        %v284 = vld [vmem:[%s1 + $0xb8] sm:$0xff]
        %v285 = vld [vmem:[%s1 + $0xc0] sm:$0xff]
        %v286 = vld [vmem:[%s1 + $0xc8] sm:$0xff]
        %v287 = vld [vmem:[%s1 + $0xd0] sm:$0xff]
        %v288 = vld [vmem:[%s1 + $0xd8] sm:$0xff]
        %v289 = vld [vmem:[%s1 + $0xe0] sm:$0xff]
        %v290 = vld [vmem:[%s1 + $0xe8] sm:$0xff]
        %v291 = vld [vmem:[%s1 + $0xf0] sm:$0xff]
        %v292 = vld [vmem:[%s1 + $0xf8] sm:$0xff]
        %v293 = vld [vmem:[%s1 + $0x100] sm:$0xff]
        %v294 = vld [vmem:[%s1 + $0x108] sm:$0xff]
        %v295 = vld [vmem:[%s1 + $0x110] sm:$0xff]
        %v296 = vld [vmem:[%s1 + $0x118] sm:$0xff]
        %v297 = vld [vmem:[%s1 + $0x120] sm:$0xff]
        %v298 = vld [vmem:[%s1 + $0x128] sm:$0xff]
        %v299 = vld [vmem:[%s1 + $0x130] sm:$0xff]
        %v300 = vld [vmem:[%s1 + $0x138] sm:$0xff]
        %v301 = vld [vmem:[%s1 + $0x140] sm:$0xff]
        %v302 = vld [vmem:[%s1 + $0x148] sm:$0xff]
        %v303 = vld [vmem:[%s1 + $0x150] sm:$0xff]
        %v304 = vld [vmem:[%s1 + $0x158] sm:$0xff]
        %v305 = vld [vmem:[%s1 + $0x160] sm:$0xff]
        %v306 = vld [vmem:[%s1 + $0x168] sm:$0xff]
        %v307 = vld [vmem:[%s1 + $0x170] sm:$0xff]
        %v308 = vld [vmem:[%s1 + $0x178] sm:$0xff]
        %v309 = vld [vmem:[%s1 + $0x180] sm:$0xff]
        %v310 = vld [vmem:[%s1 + $0x188] sm:$0xff]
        %v311 = vld [vmem:[%s1 + $0x190] sm:$0xff]
        %v312 = vld [vmem:[%s1 + $0x198] sm:$0xff]
        %v313 = vld [vmem:[%s1 + $0x1a0] sm:$0xff]
        %v314 = vld [vmem:[%s1 + $0x1a8] sm:$0xff]
        %v315 = vld [vmem:[%s1 + $0x1b0] sm:$0xff]
        %v316 = vld [vmem:[%s1 + $0x1b8] sm:$0xff]
        %v317 = vld [vmem:[%s1 + $0x1c0] sm:$0xff]
        %v318 = vld [vmem:[%s1 + $0x1c8] sm:$0xff]
        %v319 = vld [vmem:[%s1 + $0x1d0] sm:$0xff]
        %v320 = vld [vmem:[%s1 + $0x1d8] sm:$0xff]
        %v321 = vld [vmem:[%s1 + $0x1e0] sm:$0xff]
        %v322 = vld [vmem:[%s1 + $0x1e8] sm:$0xff]
        %v323 = vld [vmem:[%s1 + $0x1f0] sm:$0xff]
        %v324 = vld [vmem:[%s1 + $0x1f8] sm:$0xff]
        %v325 = vld [vmem:[%s1 + $0x200] sm:$0xff]
        %v326 = vld [vmem:[%s1 + $0x208] sm:$0xff]
        %v327 = vld [vmem:[%s1 + $0x210] sm:$0xff]
        %v328 = vld [vmem:[%s1 + $0x218] sm:$0xff]
        %v329 = vld [vmem:[%s1 + $0x220] sm:$0xff]
        %v330 = vld [vmem:[%s1 + $0x228] sm:$0xff]
        %v331 = vld [vmem:[%s1 + $0x230] sm:$0xff]
        %v332 = vld [vmem:[%s1 + $0x238] sm:$0xff]
        %v333 = vld [vmem:[%s1 + $0x240] sm:$0xff]
        %v334 = vld [vmem:[%s1 + $0x248] sm:$0xff]
        %v335 = vld [vmem:[%s1 + $0x250] sm:$0xff]
        %v336 = vld [vmem:[%s1 + $0x258] sm:$0xff]
        %v337 = vld [vmem:[%s1 + $0x260] sm:$0xff]
        %v338 = vld [vmem:[%s1 + $0x268] sm:$0xff]
        %v339 = vld [vmem:[%s1 + $0x270] sm:$0xff]
        %v340 = vld [vmem:[%s1 + $0x278] sm:$0xff]
        %v341 = vld [vmem:[%s1 + $0x280] sm:$0xff]
        %v342 = vld [vmem:[%s1 + $0x288] sm:$0xff]
        %v343 = vld [vmem:[%s1 + $0x290] sm:$0xff]
        %v344 = vld [vmem:[%s1 + $0x298] sm:$0xff]
        %v345 = vld [vmem:[%s1 + $0x2a0] sm:$0xff]
        %v346 = vld [vmem:[%s1 + $0x2a8] sm:$0xff]
        %v347 = vld [vmem:[%s1 + $0x2b0] sm:$0xff]
        %v348 = vld [vmem:[%s1 + $0x2b8] sm:$0xff]
        %v349 = vld [vmem:[%s1 + $0x2c0] sm:$0xff]
        %v350 = vld [vmem:[%s1 + $0x2c8] sm:$0xff]
        %v351 = vld [vmem:[%s1 + $0x2d0] sm:$0xff]
        %v352 = vld [vmem:[%s1 + $0x2d8] sm:$0xff]
        %v353 = vld [vmem:[%s1 + $0x2e0] sm:$0xff]
        %v354 = vld [vmem:[%s1 + $0x2e8] sm:$0xff]
        %v355 = vld [vmem:[%s1 + $0x2f0] sm:$0xff]
        %v356 = vld [vmem:[%s1 + $0x2f8] sm:$0xff]
        %357 = vmatprep.subr.mxu0 %v262
        %358 = vmatpush1.msra.mxu0 %v261
        %359 = vmatprep.subr.mxu0 %v264
        %360 = vmatpush1.msra.mxu0 %v263
        %361 = vmatprep.subr.mxu0 %v266
        %362 = vmatpush1.msra.mxu0 %v265
        %363 = vmatprep.subr.mxu0 %v268
        %364 = vmatpush1.msra.mxu0 %v267
        %365 = vmatprep.subr.mxu0 %v270
        %366 = vmatpush1.msra.mxu0 %v269
        %367 = vmatprep.subr.mxu0 %v272
        %368 = vmatpush1.msra.mxu0 %v271
        %369 = vmatprep.subr.mxu0 %v274
        %370 = vmatpush1.msra.mxu0 %v273
        %371 = vmatprep.subr.mxu0 %v276
        %372 = vmatpush1.msra.mxu0 %v275
        %373 = vmatprep.subr.mxu0 %v278
        %374 = vmatpush1.msra.mxu0 %v277
        %375 = vmatprep.subr.mxu0 %v280
        %376 = vmatpush1.msra.mxu0 %v279
        %377 = vmatprep.subr.mxu0 %v282
        %378 = vmatpush1.msra.mxu0 %v281
        %379 = vmatprep.subr.mxu0 %v284
        %380 = vmatpush1.msra.mxu0 %v283
        %381 = vmatprep.subr.mxu0 %v286
        %382 = vmatpush1.msra.mxu0 %v285
        %383 = vmatprep.subr.mxu0 %v288
        %384 = vmatpush1.msra.mxu0 %v287
        %385 = vmatprep.subr.mxu0 %v290
        %386 = vmatpush1.msra.mxu0 %v289
        %387 = vmatprep.subr.mxu0 %v292
        %388 = vmatpush1.msra.mxu0 %v291
        %389 = vmatprep.subr.mxu0 %v294
        %390 = vmatpush1.msra.mxu0 %v293
        %391 = vmatprep.subr.mxu0 %v296
        %392 = vmatpush1.msra.mxu0 %v295
        %393 = vmatprep.subr.mxu0 %v298
        %394 = vmatpush1.msra.mxu0 %v297
        %395 = vmatprep.subr.mxu0 %v300
        %396 = vmatpush1.msra.mxu0 %v299
        %397 = vmatprep.subr.mxu0 %v302
        %398 = vmatpush1.msra.mxu0 %v301
        %399 = vmatprep.subr.mxu0 %v304
        %400 = vmatpush1.msra.mxu0 %v303
        %401 = vmatprep.subr.mxu0 %v306
        %402 = vmatpush1.msra.mxu0 %v305
        %403 = vmatprep.subr.mxu0 %v308
        %404 = vmatpush1.msra.mxu0 %v307
        %405 = vmatprep.subr.mxu0 %v310
        %406 = vmatpush1.msra.mxu0 %v309
        %407 = vmatprep.subr.mxu0 %v312
        %408 = vmatpush1.msra.mxu0 %v311
        %409 = vmatprep.subr.mxu0 %v314
        %410 = vmatpush1.msra.mxu0 %v313
        %411 = vmatprep.subr.mxu0 %v316
        %412 = vmatpush1.msra.mxu0 %v315
        %413 = vmatprep.subr.mxu0 %v318
        %414 = vmatpush1.msra.mxu0 %v317
        %415 = vmatprep.subr.mxu0 %v320
        %416 = vmatpush1.msra.mxu0 %v319
        %417 = vmatprep.subr.mxu0 %v322
        %418 = vmatpush1.msra.mxu0 %v321
        %419 = vmatprep.subr.mxu0 %v324
        %420 = vmatpush1.msra.mxu0 %v323
        %421 = vmatprep.mubr.f32.mxu0 %v166
        %422 = vmatmul.mubr.f32.gmra.mrb[0].mxu0 %v165
        %v423 = vpop.f32.mrb[0].mxu0
        %v424 = vadd.f32 0.0, %v423
        %v425 = vpop.f32.mrb[0].mxu0
        %v426 = vadd.f32 0.0, %v425
        %427 = vmatprep.mubr.f32.mxu0 %v169
        %428 = vmatmul.mubr.f32.gmra.mrb[0].mxu0 %v168
        %v429 = vpop.f32.mrb[0].mxu0
        %v430 = vadd.f32 0.0, %v429
        %v431 = vpop.f32.mrb[0].mxu0
        %v432 = vadd.f32 0.0, %v431
        %433 = vmatprep.mubr.f32.mxu0 %v172
        %434 = vmatmul.mubr.f32.gmra.mrb[0].mxu0 %v171
        %v435 = vpop.f32.mrb[0].mxu0
        %v436 = vadd.f32 0.0, %v435
        %v437 = vpop.f32.mrb[0].mxu0
        %v438 = vadd.f32 0.0, %v437
        %439 = vmatprep.mubr.f32.mxu0 %v175
        %440 = vmatmul.mubr.f32.gmra.mrb[0].mxu0 %v174
        %v441 = vpop.f32.mrb[0].mxu0
        %v442 = vadd.f32 0.0, %v441
        %v443 = vpop.f32.mrb[0].mxu0
        %v444 = vadd.f32 0.0, %v443
        %445 = vmatprep.mubr.f32.mxu0 %v178
        %446 = vmatmul.mubr.f32.gmra.mrb[0].mxu0 %v177
        %v447 = vpop.f32.mrb[0].mxu0
        %v448 = vadd.f32 0.0, %v447
        %v449 = vpop.f32.mrb[0].mxu0
        %v450 = vadd.f32 0.0, %v449
        %451 = vmatprep.mubr.f32.mxu0 %v181
        %452 = vmatmul.mubr.f32.gmra.mrb[0].mxu0 %v180
        %v453 = vpop.f32.mrb[0].mxu0
        %v454 = vadd.f32 0.0, %v453
        %v455 = vpop.f32.mrb[0].mxu0
        %v456 = vadd.f32 0.0, %v455
        %457 = vmatprep.mubr.f32.mxu0 %v184
        %458 = vmatmul.mubr.f32.gmra.mrb[0].mxu0 %v183
        %v459 = vpop.f32.mrb[0].mxu0
        %v460 = vadd.f32 0.0, %v459
        %v461 = vpop.f32.mrb[0].mxu0
        %v462 = vadd.f32 0.0, %v461
        %463 = vmatprep.mubr.f32.mxu0 %v187
        %464 = vmatmul.mubr.f32.gmra.mrb[0].mxu0 %v186
        %v465 = vpop.f32.mrb[0].mxu0
        %v466 = vadd.f32 0.0, %v465
        %v467 = vpop.f32.mrb[0].mxu0
        %v468 = vadd.f32 0.0, %v467
        %469 = vmatprep.mubr.f32.mxu0 %v190
        %470 = vmatmul.mubr.f32.gmra.mrb[0].mxu0 %v189
        %v471 = vpop.f32.mrb[0].mxu0
        %v472 = vadd.f32 0.0, %v471
        %v473 = vpop.f32.mrb[0].mxu0
        %v474 = vadd.f32 0.0, %v473
        %475 = vmatprep.mubr.f32.mxu0 %v193
        %476 = vmatmul.mubr.f32.gmra.mrb[0].mxu0 %v192
        %v477 = vpop.f32.mrb[0].mxu0
        %v478 = vadd.f32 0.0, %v477
        %v479 = vpop.f32.mrb[0].mxu0
        %v480 = vadd.f32 0.0, %v479
        %481 = vmatprep.mubr.f32.mxu0 %v196
        %482 = vmatmul.mubr.f32.gmra.mrb[0].mxu0 %v195
        %v483 = vpop.f32.mrb[0].mxu0
        %v484 = vadd.f32 0.0, %v483
        %v485 = vpop.f32.mrb[0].mxu0
        %v486 = vadd.f32 0.0, %v485
        %487 = vmatprep.mubr.f32.mxu0 %v199
        %488 = vmatmul.mubr.f32.gmra.mrb[0].mxu0 %v198
        %v489 = vpop.f32.mrb[0].mxu0
        %v490 = vadd.f32 0.0, %v489
        %v491 = vpop.f32.mrb[0].mxu0
        %v492 = vadd.f32 0.0, %v491
        %493 = vmatprep.mubr.f32.mxu0 %v202
        %494 = vmatmul.mubr.f32.gmra.mrb[0].mxu0 %v201
        %v495 = vpop.f32.mrb[0].mxu0
        %v496 = vadd.f32 0.0, %v495
        %v497 = vpop.f32.mrb[0].mxu0
        %v498 = vadd.f32 0.0, %v497
        %499 = vmatprep.mubr.f32.mxu0 %v205
        %500 = vmatmul.mubr.f32.gmra.mrb[0].mxu0 %v204
        %v501 = vpop.f32.mrb[0].mxu0
        %v502 = vadd.f32 0.0, %v501
        %v503 = vpop.f32.mrb[0].mxu0
        %v504 = vadd.f32 0.0, %v503
        %505 = vmatprep.mubr.f32.mxu0 %v208
        %506 = vmatmul.mubr.f32.gmra.mrb[0].mxu0 %v207
        %v507 = vpop.f32.mrb[0].mxu0
        %v508 = vadd.f32 0.0, %v507
        %v509 = vpop.f32.mrb[0].mxu0
        %v510 = vadd.f32 0.0, %v509
        %511 = vmatprep.mubr.f32.mxu0 %v211
        %512 = vmatmul.mubr.f32.gmra.mrb[0].mxu0 %v210
        %v513 = vpop.f32.mrb[0].mxu0
        %v514 = vadd.f32 0.0, %v513
        %v515 = vpop.f32.mrb[0].mxu0
        %v516 = vadd.f32 0.0, %v515
        %517 = vmatprep.mubr.f32.mxu0 %v214
        %518 = vmatmul.mubr.f32.gmra.mrb[0].mxu0 %v213
        %v519 = vpop.f32.mrb[0].mxu0
        %v520 = vadd.f32 0.0, %v519
        %v521 = vpop.f32.mrb[0].mxu0
        %v522 = vadd.f32 0.0, %v521
        %523 = vmatprep.mubr.f32.mxu0 %v217
        %524 = vmatmul.mubr.f32.gmra.mrb[0].mxu0 %v216
        %v525 = vpop.f32.mrb[0].mxu0
        %v526 = vadd.f32 0.0, %v525
        %v527 = vpop.f32.mrb[0].mxu0
        %v528 = vadd.f32 0.0, %v527
        %529 = vmatprep.mubr.f32.mxu0 %v220
        %530 = vmatmul.mubr.f32.gmra.mrb[0].mxu0 %v219
        %v531 = vpop.f32.mrb[0].mxu0
        %v532 = vadd.f32 0.0, %v531
        %v533 = vpop.f32.mrb[0].mxu0
        %v534 = vadd.f32 0.0, %v533
        %535 = vmatprep.mubr.f32.mxu0 %v223
        %536 = vmatmul.mubr.f32.gmra.mrb[0].mxu0 %v222
        %v537 = vpop.f32.mrb[0].mxu0
        %v538 = vadd.f32 0.0, %v537
        %v539 = vpop.f32.mrb[0].mxu0
        %v540 = vadd.f32 0.0, %v539
        %541 = vmatprep.mubr.f32.mxu0 %v226
        %542 = vmatmul.mubr.f32.gmra.mrb[0].mxu0 %v225
        %v543 = vpop.f32.mrb[0].mxu0
        %v544 = vadd.f32 0.0, %v543
        %v545 = vpop.f32.mrb[0].mxu0
        %v546 = vadd.f32 0.0, %v545
        %547 = vmatprep.mubr.f32.mxu0 %v229
        %548 = vmatmul.mubr.f32.gmra.mrb[0].mxu0 %v228
        %v549 = vpop.f32.mrb[0].mxu0
        %v550 = vadd.f32 0.0, %v549
        %v551 = vpop.f32.mrb[0].mxu0
        %v552 = vadd.f32 0.0, %v551
        %553 = vmatprep.mubr.f32.mxu0 %v232
        %554 = vmatmul.mubr.f32.gmra.mrb[0].mxu0 %v231
        %v555 = vpop.f32.mrb[0].mxu0
        %v556 = vadd.f32 0.0, %v555
        %v557 = vpop.f32.mrb[0].mxu0
        %v558 = vadd.f32 0.0, %v557
        %559 = vmatprep.mubr.f32.mxu0 %v235
        %560 = vmatmul.mubr.f32.gmra.mrb[0].mxu0 %v234
        %v561 = vpop.f32.mrb[0].mxu0
        %v562 = vadd.f32 0.0, %v561
        %v563 = vpop.f32.mrb[0].mxu0
        %v564 = vadd.f32 0.0, %v563
        %565 = vmatprep.mubr.f32.mxu0 %v238
        %566 = vmatmul.mubr.f32.gmra.mrb[0].mxu0 %v237
        %v567 = vpop.f32.mrb[0].mxu0
        %v568 = vadd.f32 0.0, %v567
        %v569 = vpop.f32.mrb[0].mxu0
        %v570 = vadd.f32 0.0, %v569
        %571 = vmatprep.mubr.f32.mxu0 %v241
        %572 = vmatmul.mubr.f32.gmra.mrb[0].mxu0 %v240
        %v573 = vpop.f32.mrb[0].mxu0
        %v574 = vadd.f32 0.0, %v573
        %v575 = vpop.f32.mrb[0].mxu0
        %v576 = vadd.f32 0.0, %v575
        %577 = vmatprep.mubr.f32.mxu0 %v244
        %578 = vmatmul.mubr.f32.gmra.mrb[0].mxu0 %v243
        %v579 = vpop.f32.mrb[0].mxu0
        %v580 = vadd.f32 0.0, %v579
        %v581 = vpop.f32.mrb[0].mxu0
        %v582 = vadd.f32 0.0, %v581
        %583 = vmatprep.mubr.f32.mxu0 %v247
        %584 = vmatmul.mubr.f32.gmra.mrb[0].mxu0 %v246
        %v585 = vpop.f32.mrb[0].mxu0
        %v586 = vadd.f32 0.0, %v585
        %v587 = vpop.f32.mrb[0].mxu0
        %v588 = vadd.f32 0.0, %v587
        %589 = vmatprep.mubr.f32.mxu0 %v250
        %590 = vmatmul.mubr.f32.gmra.mrb[0].mxu0 %v249
        %v591 = vpop.f32.mrb[0].mxu0
        %v592 = vadd.f32 0.0, %v591
        %v593 = vpop.f32.mrb[0].mxu0
        %v594 = vadd.f32 0.0, %v593
        %595 = vmatprep.mubr.f32.mxu0 %v253
        %596 = vmatmul.mubr.f32.gmra.mrb[0].mxu0 %v252
        %v597 = vpop.f32.mrb[0].mxu0
        %v598 = vadd.f32 0.0, %v597
        %v599 = vpop.f32.mrb[0].mxu0
        %v600 = vadd.f32 0.0, %v599
        %601 = vmatprep.mubr.f32.mxu0 %v256
        %602 = vmatmul.mubr.f32.gmra.mrb[0].mxu0 %v255
        %v603 = vpop.f32.mrb[0].mxu0
        %v604 = vadd.f32 0.0, %v603
        %v605 = vpop.f32.mrb[0].mxu0
        %v606 = vadd.f32 0.0, %v605
        %607 = vmatprep.mubr.f32.mxu0 %v259
        %608 = vmatmul.mubr.f32.gmra.mrb[0].mxu0 %v258
        %v609 = vpop.f32.mrb[0].mxu0
        %v610 = vadd.f32 0.0, %v609
        %v611 = vpop.f32.mrb[0].mxu0
        %v612 = vadd.f32 0.0, %v611
        %613 = vdwg.mxu0
        %614 = vmatprep.subr.mxu0 %v326
        %615 = vmatpush1.msra.mxu0 %v325
        %616 = vmatprep.subr.mxu0 %v328
        %617 = vmatpush1.msra.mxu0 %v327
        %618 = vmatprep.subr.mxu0 %v330
        %619 = vmatpush1.msra.mxu0 %v329
        %620 = vmatprep.subr.mxu0 %v332
        %621 = vmatpush1.msra.mxu0 %v331
        %622 = vmatprep.subr.mxu0 %v334
        %623 = vmatpush1.msra.mxu0 %v333
        %624 = vmatprep.subr.mxu0 %v336
        %625 = vmatpush1.msra.mxu0 %v335
        %626 = vmatprep.subr.mxu0 %v338
        %627 = vmatpush1.msra.mxu0 %v337
        %628 = vmatprep.subr.mxu0 %v340
        %629 = vmatpush1.msra.mxu0 %v339
        %630 = vmatprep.subr.mxu0 %v342
        %631 = vmatpush1.msra.mxu0 %v341
        %632 = vmatprep.subr.mxu0 %v344
        %633 = vmatpush1.msra.mxu0 %v343
        %634 = vmatprep.subr.mxu0 %v346
        %635 = vmatpush1.msra.mxu0 %v345
        %636 = vmatprep.subr.mxu0 %v348
        %637 = vmatpush1.msra.mxu0 %v347
        %638 = vmatprep.subr.mxu0 %v350
        %639 = vmatpush1.msra.mxu0 %v349
        %640 = vmatprep.subr.mxu0 %v352
        %641 = vmatpush1.msra.mxu0 %v351
        %642 = vmatprep.subr.mxu0 %v354
        %643 = vmatpush1.msra.mxu0 %v353
        %644 = vmatprep.subr.mxu0 %v356
        %645 = vmatpush1.msra.mxu0 %v355
        %646 = vmatprep.subr.mxu0 0.0
        %647 = vmatpush1.msra.mxu0 0.0
        %648 = vmatprep.subr.mxu0 0.0
        %649 = vmatpush1.msra.mxu0 0.0
        %650 = vmatprep.subr.mxu0 0.0
        %651 = vmatpush1.msra.mxu0 0.0
        %652 = vmatprep.subr.mxu0 0.0
        %653 = vmatpush1.msra.mxu0 0.0
        %654 = vmatprep.subr.mxu0 0.0
        %655 = vmatpush1.msra.mxu0 0.0
        %656 = vmatprep.subr.mxu0 0.0
        %657 = vmatpush1.msra.mxu0 0.0
        %658 = vmatprep.subr.mxu0 0.0
        %659 = vmatpush1.msra.mxu0 0.0
        %660 = vmatprep.subr.mxu0 0.0
        %661 = vmatpush1.msra.mxu0 0.0
        %662 = vmatprep.subr.mxu0 0.0
        %663 = vmatpush1.msra.mxu0 0.0
        %664 = vmatprep.subr.mxu0 0.0
        %665 = vmatpush1.msra.mxu0 0.0
        %666 = vmatprep.subr.mxu0 0.0
        %667 = vmatpush1.msra.mxu0 0.0
        %668 = vmatprep.subr.mxu0 0.0
        %669 = vmatpush1.msra.mxu0 0.0
        %670 = vmatprep.subr.mxu0 0.0
        %671 = vmatpush1.msra.mxu0 0.0
        %672 = vmatprep.subr.mxu0 0.0
        %673 = vmatpush1.msra.mxu0 0.0
        %674 = vmatprep.subr.mxu0 0.0
        %675 = vmatpush1.msra.mxu0 0.0
        %676 = vmatprep.subr.mxu0 0.0
        %677 = vmatpush1.msra.mxu0 0.0
        %678 = vmatprep.mubr.f32.mxu0 0.0
        %679 = vmatmul.mubr.f32.gmra.mrb[0].mxu0 %v167
        %v680 = vpop.f32.mrb[0].mxu0
        %v681 = vadd.f32 %v424, %v680
        %v682 = vpop.f32.mrb[0].mxu0
        %v683 = vadd.f32 %v426, %v682
        %684 = vmatprep.mubr.f32.mxu0 0.0
        %685 = vmatmul.mubr.f32.gmra.mrb[0].mxu0 %v170
        %v686 = vpop.f32.mrb[0].mxu0
        %v687 = vadd.f32 %v430, %v686
        %v688 = vpop.f32.mrb[0].mxu0
        %v689 = vadd.f32 %v432, %v688
        %690 = vmatprep.mubr.f32.mxu0 0.0
        %691 = vmatmul.mubr.f32.gmra.mrb[0].mxu0 %v173
        %v692 = vpop.f32.mrb[0].mxu0
        %v693 = vadd.f32 %v436, %v692
        %v694 = vpop.f32.mrb[0].mxu0
        %v695 = vadd.f32 %v438, %v694
        %696 = vmatprep.mubr.f32.mxu0 0.0
        %697 = vmatmul.mubr.f32.gmra.mrb[0].mxu0 %v176
        %v698 = vpop.f32.mrb[0].mxu0
        %v699 = vadd.f32 %v442, %v698
        %v700 = vpop.f32.mrb[0].mxu0
        %v701 = vadd.f32 %v444, %v700
        %702 = vmatprep.mubr.f32.mxu0 0.0
        %703 = vmatmul.mubr.f32.gmra.mrb[0].mxu0 %v179
        %v704 = vpop.f32.mrb[0].mxu0
        %v705 = vadd.f32 %v448, %v704
        %v706 = vpop.f32.mrb[0].mxu0
        %v707 = vadd.f32 %v450, %v706
        %708 = vmatprep.mubr.f32.mxu0 0.0
        %709 = vmatmul.mubr.f32.gmra.mrb[0].mxu0 %v182
        %v710 = vpop.f32.mrb[0].mxu0
        %v711 = vadd.f32 %v454, %v710
        %v712 = vpop.f32.mrb[0].mxu0
        %v713 = vadd.f32 %v456, %v712
        %714 = vmatprep.mubr.f32.mxu0 0.0
        %715 = vmatmul.mubr.f32.gmra.mrb[0].mxu0 %v185
        %v716 = vpop.f32.mrb[0].mxu0
        %v717 = vadd.f32 %v460, %v716
        %v718 = vpop.f32.mrb[0].mxu0
        %v719 = vadd.f32 %v462, %v718
        %720 = vmatprep.mubr.f32.mxu0 0.0
        %721 = vmatmul.mubr.f32.gmra.mrb[0].mxu0 %v188
        %v722 = vpop.f32.mrb[0].mxu0
        %v723 = vadd.f32 %v466, %v722
        %v724 = vpop.f32.mrb[0].mxu0
        %v725 = vadd.f32 %v468, %v724
        %726 = vmatprep.mubr.f32.mxu0 0.0
        %727 = vmatmul.mubr.f32.gmra.mrb[0].mxu0 %v191
        %v728 = vpop.f32.mrb[0].mxu0
        %v729 = vadd.f32 %v472, %v728
        %v730 = vpop.f32.mrb[0].mxu0
        %v731 = vadd.f32 %v474, %v730
        %732 = vmatprep.mubr.f32.mxu0 0.0
        %733 = vmatmul.mubr.f32.gmra.mrb[0].mxu0 %v194
        %v734 = vpop.f32.mrb[0].mxu0
        %v735 = vadd.f32 %v478, %v734
        %v736 = vpop.f32.mrb[0].mxu0
        %v737 = vadd.f32 %v480, %v736
        %738 = vmatprep.mubr.f32.mxu0 0.0
        %739 = vmatmul.mubr.f32.gmra.mrb[0].mxu0 %v197
        %v740 = vpop.f32.mrb[0].mxu0
        %v741 = vadd.f32 %v484, %v740
        %v742 = vpop.f32.mrb[0].mxu0
        %v743 = vadd.f32 %v486, %v742
        %744 = vmatprep.mubr.f32.mxu0 0.0
        %745 = vmatmul.mubr.f32.gmra.mrb[0].mxu0 %v200
        %v746 = vpop.f32.mrb[0].mxu0
        %v747 = vadd.f32 %v490, %v746
        %v748 = vpop.f32.mrb[0].mxu0
        %v749 = vadd.f32 %v492, %v748
        %750 = vmatprep.mubr.f32.mxu0 0.0
        %751 = vmatmul.mubr.f32.gmra.mrb[0].mxu0 %v203
        %v752 = vpop.f32.mrb[0].mxu0
        %v753 = vadd.f32 %v496, %v752
        %v754 = vpop.f32.mrb[0].mxu0
        %v755 = vadd.f32 %v498, %v754
        %756 = vmatprep.mubr.f32.mxu0 0.0
        %757 = vmatmul.mubr.f32.gmra.mrb[0].mxu0 %v206
        %v758 = vpop.f32.mrb[0].mxu0
        %v759 = vadd.f32 %v502, %v758
        %v760 = vpop.f32.mrb[0].mxu0
        %v761 = vadd.f32 %v504, %v760
        %762 = vmatprep.mubr.f32.mxu0 0.0
        %763 = vmatmul.mubr.f32.gmra.mrb[0].mxu0 %v209
        %v764 = vpop.f32.mrb[0].mxu0
        %v765 = vadd.f32 %v508, %v764
        %v766 = vpop.f32.mrb[0].mxu0
        %v767 = vadd.f32 %v510, %v766
        %768 = vmatprep.mubr.f32.mxu0 0.0
        %769 = vmatmul.mubr.f32.gmra.mrb[0].mxu0 %v212
        %v770 = vpop.f32.mrb[0].mxu0
        %v771 = vadd.f32 %v514, %v770
        %v772 = vpop.f32.mrb[0].mxu0
        %v773 = vadd.f32 %v516, %v772
        %774 = vmatprep.mubr.f32.mxu0 0.0
        %775 = vmatmul.mubr.f32.gmra.mrb[0].mxu0 %v215
        %v776 = vpop.f32.mrb[0].mxu0
        %v777 = vadd.f32 %v520, %v776
        %v778 = vpop.f32.mrb[0].mxu0
        %v779 = vadd.f32 %v522, %v778
        %780 = vmatprep.mubr.f32.mxu0 0.0
        %781 = vmatmul.mubr.f32.gmra.mrb[0].mxu0 %v218
        %v782 = vpop.f32.mrb[0].mxu0
        %v783 = vadd.f32 %v526, %v782
        %v784 = vpop.f32.mrb[0].mxu0
        %v785 = vadd.f32 %v528, %v784
        %786 = vmatprep.mubr.f32.mxu0 0.0
        %787 = vmatmul.mubr.f32.gmra.mrb[0].mxu0 %v221
        %v788 = vpop.f32.mrb[0].mxu0
        %v789 = vadd.f32 %v532, %v788
        %v790 = vpop.f32.mrb[0].mxu0
        %v791 = vadd.f32 %v534, %v790
        %792 = vmatprep.mubr.f32.mxu0 0.0
        %793 = vmatmul.mubr.f32.gmra.mrb[0].mxu0 %v224
        %v794 = vpop.f32.mrb[0].mxu0
        %v795 = vadd.f32 %v538, %v794
        %v796 = vpop.f32.mrb[0].mxu0
        %v797 = vadd.f32 %v540, %v796
        %798 = vmatprep.mubr.f32.mxu0 0.0
        %799 = vmatmul.mubr.f32.gmra.mrb[0].mxu0 %v227
        %v800 = vpop.f32.mrb[0].mxu0
        %v801 = vadd.f32 %v544, %v800
        %v802 = vpop.f32.mrb[0].mxu0
        %v803 = vadd.f32 %v546, %v802
        %804 = vmatprep.mubr.f32.mxu0 0.0
        %805 = vmatmul.mubr.f32.gmra.mrb[0].mxu0 %v230
        %v806 = vpop.f32.mrb[0].mxu0
        %v807 = vadd.f32 %v550, %v806
        %v808 = vpop.f32.mrb[0].mxu0
        %v809 = vadd.f32 %v552, %v808
        %810 = vmatprep.mubr.f32.mxu0 0.0
        %811 = vmatmul.mubr.f32.gmra.mrb[0].mxu0 %v233
        %v812 = vpop.f32.mrb[0].mxu0
        %v813 = vadd.f32 %v556, %v812
        %v814 = vpop.f32.mrb[0].mxu0
        %v815 = vadd.f32 %v558, %v814
        %816 = vmatprep.mubr.f32.mxu0 0.0
        %817 = vmatmul.mubr.f32.gmra.mrb[0].mxu0 %v236
        %v818 = vpop.f32.mrb[0].mxu0
        %v819 = vadd.f32 %v562, %v818
        %v820 = vpop.f32.mrb[0].mxu0
        %v821 = vadd.f32 %v564, %v820
        %822 = vmatprep.mubr.f32.mxu0 0.0
        %823 = vmatmul.mubr.f32.gmra.mrb[0].mxu0 %v239
        %v824 = vpop.f32.mrb[0].mxu0
        %v825 = vadd.f32 %v568, %v824
        %v826 = vpop.f32.mrb[0].mxu0
        %v827 = vadd.f32 %v570, %v826
        %828 = vmatprep.mubr.f32.mxu0 0.0
        %829 = vmatmul.mubr.f32.gmra.mrb[0].mxu0 %v242
        %v830 = vpop.f32.mrb[0].mxu0
        %v831 = vadd.f32 %v574, %v830
        %v832 = vpop.f32.mrb[0].mxu0
        %v833 = vadd.f32 %v576, %v832
        %834 = vmatprep.mubr.f32.mxu0 0.0
        %835 = vmatmul.mubr.f32.gmra.mrb[0].mxu0 %v245
        %v836 = vpop.f32.mrb[0].mxu0
        %v837 = vadd.f32 %v580, %v836
        %v838 = vpop.f32.mrb[0].mxu0
        %v839 = vadd.f32 %v582, %v838
        %840 = vmatprep.mubr.f32.mxu0 0.0
        %841 = vmatmul.mubr.f32.gmra.mrb[0].mxu0 %v248
        %v842 = vpop.f32.mrb[0].mxu0
        %v843 = vadd.f32 %v586, %v842
        %v844 = vpop.f32.mrb[0].mxu0
        %v845 = vadd.f32 %v588, %v844
        %846 = vmatprep.mubr.f32.mxu0 0.0
        %847 = vmatmul.mubr.f32.gmra.mrb[0].mxu0 %v251
        %v848 = vpop.f32.mrb[0].mxu0
        %v849 = vadd.f32 %v592, %v848
        %v850 = vpop.f32.mrb[0].mxu0
        %v851 = vadd.f32 %v594, %v850
        %852 = vmatprep.mubr.f32.mxu0 0.0
        %853 = vmatmul.mubr.f32.gmra.mrb[0].mxu0 %v254
        %v854 = vpop.f32.mrb[0].mxu0
        %v855 = vadd.f32 %v598, %v854
        %v856 = vpop.f32.mrb[0].mxu0
        %v857 = vadd.f32 %v600, %v856
        %858 = vmatprep.mubr.f32.mxu0 0.0
        %859 = vmatmul.mubr.f32.gmra.mrb[0].mxu0 %v257
        %v860 = vpop.f32.mrb[0].mxu0
        %v861 = vadd.f32 %v604, %v860
        %v862 = vpop.f32.mrb[0].mxu0
        %v863 = vadd.f32 %v606, %v862
        %864 = vmatprep.mubr.f32.mxu0 0.0
        %865 = vmatmul.mubr.f32.gmra.mrb[0].mxu0 %v260
        %v866 = vpop.f32.mrb[0].mxu0
        %v867 = vadd.f32 %v610, %v866
        %v868 = vpop.f32.mrb[0].mxu0
        %v869 = vadd.f32 %v612, %v868
        %870 = vdwg.mxu0
        %879 = vrot.lane.b32.xlu0 %v681, 64
        %v880 = vpop.permute.xlu0 %879
        %881 = vrot.lane.b32.xlu0 %v687, 64
        %v882 = vpop.permute.xlu0 %881
        %883 = vrot.lane.b32.xlu0 %v693, 64
        %v884 = vpop.permute.xlu0 %883
        %885 = vrot.lane.b32.xlu0 %v699, 64
        %v886 = vpop.permute.xlu0 %885
        %887 = vrot.lane.b32.xlu0 %v705, 64
        %v888 = vpop.permute.xlu0 %887
        %889 = vrot.lane.b32.xlu0 %v711, 64
        %v890 = vpop.permute.xlu0 %889
        %891 = vrot.lane.b32.xlu0 %v717, 64
        %v892 = vpop.permute.xlu0 %891
        %893 = vrot.lane.b32.xlu0 %v723, 64
        %v894 = vpop.permute.xlu0 %893
        %vm895 = vcmask 523264
        %v896 = vsel %vm895, %v681, 0
        %v898 = vsel %vm895, %v687, 0
        %v900 = vsel %vm895, %v693, 0
        %v902 = vsel %vm895, %v699, 0
        %v904 = vsel %vm895, %v705, 0
        %v906 = vsel %vm895, %v711, 0
        %v908 = vsel %vm895, %v717, 0
        %v910 = vsel %vm895, %v723, 0
        %v912 = vsel %vm895, %v880, 0
        %v914 = vsel %vm895, %v882, 0
        %v916 = vsel %vm895, %v884, 0
        %v918 = vsel %vm895, %v886, 0
        %v920 = vsel %vm895, %v888, 0
        %v922 = vsel %vm895, %v890, 0
        %v924 = vsel %vm895, %v892, 0
        %v926 = vsel %vm895, %v894, 0
        %928 = vmatprep.subr.mxu0 0.0
        %929 = vmatpush1.xpose.msra.mxu0 %v912
        %930 = vmatprep.subr.mxu0 0.0
        %931 = vmatpush1.xpose.msra.mxu0 %v914
        %932 = vmatprep.subr.mxu0 0.0
        %933 = vmatpush1.xpose.msra.mxu0 %v916
        %934 = vmatprep.subr.mxu0 0.0
        %935 = vmatpush1.xpose.msra.mxu0 %v918
        %936 = vmatprep.subr.mxu0 0.0
        %937 = vmatpush1.xpose.msra.mxu0 %v920
        %938 = vmatprep.subr.mxu0 0.0
        %939 = vmatpush1.xpose.msra.mxu0 %v922
        %940 = vmatprep.subr.mxu0 0.0
        %941 = vmatpush1.xpose.msra.mxu0 %v924
        %942 = vmatprep.subr.mxu0 0.0
        %943 = vmatpush1.xpose.msra.mxu0 %v926
        %944 = vmatprep.subr.mxu0 0.0
        %945 = vmatpush1.xpose.msra.mxu0 0.0
        %946 = vmatprep.subr.mxu0 0.0
        %947 = vmatpush1.xpose.msra.mxu0 0.0
        %948 = vmatprep.subr.mxu0 0.0
        %949 = vmatpush1.xpose.msra.mxu0 0.0
        %950 = vmatprep.subr.mxu0 0.0
        %951 = vmatpush1.xpose.msra.mxu0 0.0
        %952 = vmatprep.subr.mxu0 0.0
        %953 = vmatpush1.xpose.msra.mxu0 0.0
        %954 = vmatprep.subr.mxu0 0.0
        %955 = vmatpush1.xpose.msra.mxu0 0.0
        %956 = vmatprep.subr.mxu0 0.0
        %957 = vmatpush1.xpose.msra.mxu0 0.0
        %958 = vmatprep.subr.mxu0 0.0
        %959 = vmatpush1.xpose.msra.mxu0 0.0
        %960 = vmatprep.subr.mxu0 0.0
        %961 = vmatpush1.xpose.msra.mxu0 0.0
        %962 = vmatprep.subr.mxu0 0.0
        %963 = vmatpush1.xpose.msra.mxu0 0.0
        %964 = vmatprep.subr.mxu0 0.0
        %965 = vmatpush1.xpose.msra.mxu0 0.0
        %966 = vmatprep.subr.mxu0 0.0
        %967 = vmatpush1.xpose.msra.mxu0 0.0
        %968 = vmatprep.subr.mxu0 0.0
        %969 = vmatpush1.xpose.msra.mxu0 0.0
        %970 = vmatprep.subr.mxu0 0.0
        %971 = vmatpush1.xpose.msra.mxu0 0.0
        %972 = vmatprep.subr.mxu0 0.0
        %973 = vmatpush1.xpose.msra.mxu0 0.0
        %974 = vmatprep.subr.mxu0 0.0
        %975 = vmatpush1.xpose.msra.mxu0 0.0
        %976 = vmatprep.subr.mxu0 0.0
        %977 = vmatpush1.xpose.msra.mxu0 0.0
        %978 = vmatprep.subr.mxu0 0.0
        %979 = vmatpush1.xpose.msra.mxu0 0.0
        %980 = vmatprep.subr.mxu0 0.0
        %981 = vmatpush1.xpose.msra.mxu0 0.0
        %982 = vmatprep.subr.mxu0 0.0
        %983 = vmatpush1.xpose.msra.mxu0 0.0
        %984 = vmatprep.subr.mxu0 0.0
        %985 = vmatpush1.xpose.msra.mxu0 0.0
        %986 = vmatprep.subr.mxu0 0.0
        %987 = vmatpush1.xpose.msra.mxu0 0.0
        %988 = vmatprep.subr.mxu0 0.0
        %989 = vmatpush1.xpose.msra.mxu0 0.0
        %990 = vmatprep.subr.mxu0 0.0
        %991 = vmatpush1.xpose.msra.mxu0 0.0
        %992 = vmatprep.mubr.f32.mxu0 0.0
        %993 = vmatmul.mubr.f32.gmra.mrb[0].mxu0 %v896
        %v994 = vpop.f32.mrb[0].mxu0
        %v995 = vadd.f32 0.0, %v994
        %v996 = vpop.f32.mrb[0].mxu0
        %997 = vmatprep.mubr.f32.mxu0 0.0
        %998 = vmatmul.mubr.f32.gmra.mrb[0].mxu0 %v898
        %v999 = vpop.f32.mrb[0].mxu0
        %v1000 = vadd.f32 0.0, %v999
        %v1001 = vpop.f32.mrb[0].mxu0
        %1002 = vmatprep.mubr.f32.mxu0 0.0
        %1003 = vmatmul.mubr.f32.gmra.mrb[0].mxu0 %v900
        %v1004 = vpop.f32.mrb[0].mxu0
        %v1005 = vadd.f32 0.0, %v1004
        %v1006 = vpop.f32.mrb[0].mxu0
        %1007 = vmatprep.mubr.f32.mxu0 0.0
        %1008 = vmatmul.mubr.f32.gmra.mrb[0].mxu0 %v902
        %v1009 = vpop.f32.mrb[0].mxu0
        %v1010 = vadd.f32 0.0, %v1009
        %v1011 = vpop.f32.mrb[0].mxu0
        %1012 = vmatprep.mubr.f32.mxu0 0.0
        %1013 = vmatmul.mubr.f32.gmra.mrb[0].mxu0 %v904
        %v1014 = vpop.f32.mrb[0].mxu0
        %v1015 = vadd.f32 0.0, %v1014
        %v1016 = vpop.f32.mrb[0].mxu0
        %1017 = vmatprep.mubr.f32.mxu0 0.0
        %1018 = vmatmul.mubr.f32.gmra.mrb[0].mxu0 %v906
        %v1019 = vpop.f32.mrb[0].mxu0
        %v1020 = vadd.f32 0.0, %v1019
        %v1021 = vpop.f32.mrb[0].mxu0
        %1022 = vmatprep.mubr.f32.mxu0 0.0
        %1023 = vmatmul.mubr.f32.gmra.mrb[0].mxu0 %v908
        %v1024 = vpop.f32.mrb[0].mxu0
        %v1025 = vadd.f32 0.0, %v1024
        %v1026 = vpop.f32.mrb[0].mxu0
        %1027 = vmatprep.mubr.f32.mxu0 0.0
        %1028 = vmatmul.mubr.f32.gmra.mrb[0].mxu0 %v910
        %v1029 = vpop.f32.mrb[0].mxu0
        %v1030 = vadd.f32 0.0, %v1029
        %v1031 = vpop.f32.mrb[0].mxu0
        %1032 = vdwg.mxu0
        %1041 = vrot.lane.b32.xlu0 %v729, 64
        %v1042 = vpop.permute.xlu0 %1041
        %1043 = vrot.lane.b32.xlu0 %v735, 64
        %v1044 = vpop.permute.xlu0 %1043
        %1045 = vrot.lane.b32.xlu0 %v741, 64
        %v1046 = vpop.permute.xlu0 %1045
        %1047 = vrot.lane.b32.xlu0 %v747, 64
        %v1048 = vpop.permute.xlu0 %1047
        %1049 = vrot.lane.b32.xlu0 %v753, 64
        %v1050 = vpop.permute.xlu0 %1049
        %1051 = vrot.lane.b32.xlu0 %v759, 64
        %v1052 = vpop.permute.xlu0 %1051
        %1053 = vrot.lane.b32.xlu0 %v765, 64
        %v1054 = vpop.permute.xlu0 %1053
        %1055 = vrot.lane.b32.xlu0 %v771, 64
        %v1056 = vpop.permute.xlu0 %1055
        %v1057 = vsel %vm895, %v729, 0
        %v1059 = vsel %vm895, %v735, 0
        %v1061 = vsel %vm895, %v741, 0
        %v1063 = vsel %vm895, %v747, 0
        %v1065 = vsel %vm895, %v753, 0
        %v1067 = vsel %vm895, %v759, 0
        %v1069 = vsel %vm895, %v765, 0
        %v1071 = vsel %vm895, %v771, 0
        %v1073 = vsel %vm895, %v1042, 0
        %v1075 = vsel %vm895, %v1044, 0
        %v1077 = vsel %vm895, %v1046, 0
        %v1079 = vsel %vm895, %v1048, 0
        %v1081 = vsel %vm895, %v1050, 0
        %v1083 = vsel %vm895, %v1052, 0
        %v1085 = vsel %vm895, %v1054, 0
        %v1087 = vsel %vm895, %v1056, 0
        %1089 = vmatprep.subr.mxu0 0.0
        %1090 = vmatpush1.xpose.msra.mxu0 %v1073
        %1091 = vmatprep.subr.mxu0 0.0
        %1092 = vmatpush1.xpose.msra.mxu0 %v1075
        %1093 = vmatprep.subr.mxu0 0.0
        %1094 = vmatpush1.xpose.msra.mxu0 %v1077
        %1095 = vmatprep.subr.mxu0 0.0
        %1096 = vmatpush1.xpose.msra.mxu0 %v1079
        %1097 = vmatprep.subr.mxu0 0.0
        %1098 = vmatpush1.xpose.msra.mxu0 %v1081
        %1099 = vmatprep.subr.mxu0 0.0
        %1100 = vmatpush1.xpose.msra.mxu0 %v1083
        %1101 = vmatprep.subr.mxu0 0.0
        %1102 = vmatpush1.xpose.msra.mxu0 %v1085
        %1103 = vmatprep.subr.mxu0 0.0
        %1104 = vmatpush1.xpose.msra.mxu0 %v1087
        %1105 = vmatprep.subr.mxu0 0.0
        %1106 = vmatpush1.xpose.msra.mxu0 0.0
        %1107 = vmatprep.subr.mxu0 0.0
        %1108 = vmatpush1.xpose.msra.mxu0 0.0
        %1109 = vmatprep.subr.mxu0 0.0
        %1110 = vmatpush1.xpose.msra.mxu0 0.0
        %1111 = vmatprep.subr.mxu0 0.0
        %1112 = vmatpush1.xpose.msra.mxu0 0.0
        %1113 = vmatprep.subr.mxu0 0.0
        %1114 = vmatpush1.xpose.msra.mxu0 0.0
        %1115 = vmatprep.subr.mxu0 0.0
        %1116 = vmatpush1.xpose.msra.mxu0 0.0
        %1117 = vmatprep.subr.mxu0 0.0
        %1118 = vmatpush1.xpose.msra.mxu0 0.0
        %1119 = vmatprep.subr.mxu0 0.0
        %1120 = vmatpush1.xpose.msra.mxu0 0.0
        %1121 = vmatprep.subr.mxu0 0.0
        %1122 = vmatpush1.xpose.msra.mxu0 0.0
        %1123 = vmatprep.subr.mxu0 0.0
        %1124 = vmatpush1.xpose.msra.mxu0 0.0
        %1125 = vmatprep.subr.mxu0 0.0
        %1126 = vmatpush1.xpose.msra.mxu0 0.0
        %1127 = vmatprep.subr.mxu0 0.0
        %1128 = vmatpush1.xpose.msra.mxu0 0.0
        %1129 = vmatprep.subr.mxu0 0.0
        %1130 = vmatpush1.xpose.msra.mxu0 0.0
        %1131 = vmatprep.subr.mxu0 0.0
        %1132 = vmatpush1.xpose.msra.mxu0 0.0
        %1133 = vmatprep.subr.mxu0 0.0
        %1134 = vmatpush1.xpose.msra.mxu0 0.0
        %1135 = vmatprep.subr.mxu0 0.0
        %1136 = vmatpush1.xpose.msra.mxu0 0.0
        %1137 = vmatprep.subr.mxu0 0.0
        %1138 = vmatpush1.xpose.msra.mxu0 0.0
        %1139 = vmatprep.subr.mxu0 0.0
        %1140 = vmatpush1.xpose.msra.mxu0 0.0
        %1141 = vmatprep.subr.mxu0 0.0
        %1142 = vmatpush1.xpose.msra.mxu0 0.0
        %1143 = vmatprep.subr.mxu0 0.0
        %1144 = vmatpush1.xpose.msra.mxu0 0.0
        %1145 = vmatprep.subr.mxu0 0.0
        %1146 = vmatpush1.xpose.msra.mxu0 0.0
        %1147 = vmatprep.subr.mxu0 0.0
        %1148 = vmatpush1.xpose.msra.mxu0 0.0
        %1149 = vmatprep.subr.mxu0 0.0
        %1150 = vmatpush1.xpose.msra.mxu0 0.0
        %1151 = vmatprep.subr.mxu0 0.0
        %1152 = vmatpush1.xpose.msra.mxu0 0.0
        %1153 = vmatprep.mubr.f32.mxu0 0.0
        %1154 = vmatmul.mubr.f32.gmra.mrb[0].mxu0 %v1057
        %v1155 = vpop.f32.mrb[0].mxu0
        %v1156 = vadd.f32 0.0, %v1155
        %v1157 = vpop.f32.mrb[0].mxu0
        %1158 = vmatprep.mubr.f32.mxu0 0.0
        %1159 = vmatmul.mubr.f32.gmra.mrb[0].mxu0 %v1059
        %v1160 = vpop.f32.mrb[0].mxu0
        %v1161 = vadd.f32 0.0, %v1160
        %v1162 = vpop.f32.mrb[0].mxu0
        %1163 = vmatprep.mubr.f32.mxu0 0.0
        %1164 = vmatmul.mubr.f32.gmra.mrb[0].mxu0 %v1061
        %v1165 = vpop.f32.mrb[0].mxu0
        %v1166 = vadd.f32 0.0, %v1165
        %v1167 = vpop.f32.mrb[0].mxu0
        %1168 = vmatprep.mubr.f32.mxu0 0.0
        %1169 = vmatmul.mubr.f32.gmra.mrb[0].mxu0 %v1063
        %v1170 = vpop.f32.mrb[0].mxu0
        %v1171 = vadd.f32 0.0, %v1170
        %v1172 = vpop.f32.mrb[0].mxu0
        %1173 = vmatprep.mubr.f32.mxu0 0.0
        %1174 = vmatmul.mubr.f32.gmra.mrb[0].mxu0 %v1065
        %v1175 = vpop.f32.mrb[0].mxu0
        %v1176 = vadd.f32 0.0, %v1175
        %v1177 = vpop.f32.mrb[0].mxu0
        %1178 = vmatprep.mubr.f32.mxu0 0.0
        %1179 = vmatmul.mubr.f32.gmra.mrb[0].mxu0 %v1067
        %v1180 = vpop.f32.mrb[0].mxu0
        %v1181 = vadd.f32 0.0, %v1180
        %v1182 = vpop.f32.mrb[0].mxu0
        %1183 = vmatprep.mubr.f32.mxu0 0.0
        %1184 = vmatmul.mubr.f32.gmra.mrb[0].mxu0 %v1069
        %v1185 = vpop.f32.mrb[0].mxu0
        %v1186 = vadd.f32 0.0, %v1185
        %v1187 = vpop.f32.mrb[0].mxu0
        %1188 = vmatprep.mubr.f32.mxu0 0.0
        %1189 = vmatmul.mubr.f32.gmra.mrb[0].mxu0 %v1071
        %v1190 = vpop.f32.mrb[0].mxu0
        %v1191 = vadd.f32 0.0, %v1190
        %v1192 = vpop.f32.mrb[0].mxu0
        %1193 = vdwg.mxu0
        %1202 = vrot.lane.b32.xlu0 %v777, 64
        %v1203 = vpop.permute.xlu0 %1202
        %1204 = vrot.lane.b32.xlu0 %v783, 64
        %v1205 = vpop.permute.xlu0 %1204
        %1206 = vrot.lane.b32.xlu0 %v789, 64
        %v1207 = vpop.permute.xlu0 %1206
        %1208 = vrot.lane.b32.xlu0 %v795, 64
        %v1209 = vpop.permute.xlu0 %1208
        %1210 = vrot.lane.b32.xlu0 %v801, 64
        %v1211 = vpop.permute.xlu0 %1210
        %1212 = vrot.lane.b32.xlu0 %v807, 64
        %v1213 = vpop.permute.xlu0 %1212
        %1214 = vrot.lane.b32.xlu0 %v813, 64
        %v1215 = vpop.permute.xlu0 %1214
        %1216 = vrot.lane.b32.xlu0 %v819, 64
        %v1217 = vpop.permute.xlu0 %1216
        %v1218 = vsel %vm895, %v777, 0
        %v1220 = vsel %vm895, %v783, 0
        %v1222 = vsel %vm895, %v789, 0
        %v1224 = vsel %vm895, %v795, 0
        %v1226 = vsel %vm895, %v801, 0
        %v1228 = vsel %vm895, %v807, 0
        %v1230 = vsel %vm895, %v813, 0
        %v1232 = vsel %vm895, %v819, 0
        %v1234 = vsel %vm895, %v1203, 0
        %v1236 = vsel %vm895, %v1205, 0
        %v1238 = vsel %vm895, %v1207, 0
        %v1240 = vsel %vm895, %v1209, 0
        %v1242 = vsel %vm895, %v1211, 0
        %v1244 = vsel %vm895, %v1213, 0
        %v1246 = vsel %vm895, %v1215, 0
        %v1248 = vsel %vm895, %v1217, 0
        %1250 = vmatprep.subr.mxu0 0.0
        %1251 = vmatpush1.xpose.msra.mxu0 %v1234
        %1252 = vmatprep.subr.mxu0 0.0
        %1253 = vmatpush1.xpose.msra.mxu0 %v1236
        %1254 = vmatprep.subr.mxu0 0.0
        %1255 = vmatpush1.xpose.msra.mxu0 %v1238
        %1256 = vmatprep.subr.mxu0 0.0
        %1257 = vmatpush1.xpose.msra.mxu0 %v1240
        %1258 = vmatprep.subr.mxu0 0.0
        %1259 = vmatpush1.xpose.msra.mxu0 %v1242
        %1260 = vmatprep.subr.mxu0 0.0
        %1261 = vmatpush1.xpose.msra.mxu0 %v1244
        %1262 = vmatprep.subr.mxu0 0.0
        %1263 = vmatpush1.xpose.msra.mxu0 %v1246
        %1264 = vmatprep.subr.mxu0 0.0
        %1265 = vmatpush1.xpose.msra.mxu0 %v1248
        %1266 = vmatprep.subr.mxu0 0.0
        %1267 = vmatpush1.xpose.msra.mxu0 0.0
        %1268 = vmatprep.subr.mxu0 0.0
        %1269 = vmatpush1.xpose.msra.mxu0 0.0
        %1270 = vmatprep.subr.mxu0 0.0
        %1271 = vmatpush1.xpose.msra.mxu0 0.0
        %1272 = vmatprep.subr.mxu0 0.0
        %1273 = vmatpush1.xpose.msra.mxu0 0.0
        %1274 = vmatprep.subr.mxu0 0.0
        %1275 = vmatpush1.xpose.msra.mxu0 0.0
        %1276 = vmatprep.subr.mxu0 0.0
        %1277 = vmatpush1.xpose.msra.mxu0 0.0
        %1278 = vmatprep.subr.mxu0 0.0
        %1279 = vmatpush1.xpose.msra.mxu0 0.0
        %1280 = vmatprep.subr.mxu0 0.0
        %1281 = vmatpush1.xpose.msra.mxu0 0.0
        %1282 = vmatprep.subr.mxu0 0.0
        %1283 = vmatpush1.xpose.msra.mxu0 0.0
        %1284 = vmatprep.subr.mxu0 0.0
        %1285 = vmatpush1.xpose.msra.mxu0 0.0
        %1286 = vmatprep.subr.mxu0 0.0
        %1287 = vmatpush1.xpose.msra.mxu0 0.0
        %1288 = vmatprep.subr.mxu0 0.0
        %1289 = vmatpush1.xpose.msra.mxu0 0.0
        %1290 = vmatprep.subr.mxu0 0.0
        %1291 = vmatpush1.xpose.msra.mxu0 0.0
        %1292 = vmatprep.subr.mxu0 0.0
        %1293 = vmatpush1.xpose.msra.mxu0 0.0
        %1294 = vmatprep.subr.mxu0 0.0
        %1295 = vmatpush1.xpose.msra.mxu0 0.0
        %1296 = vmatprep.subr.mxu0 0.0
        %1297 = vmatpush1.xpose.msra.mxu0 0.0
        %1298 = vmatprep.subr.mxu0 0.0
        %1299 = vmatpush1.xpose.msra.mxu0 0.0
        %1300 = vmatprep.subr.mxu0 0.0
        %1301 = vmatpush1.xpose.msra.mxu0 0.0
        %1302 = vmatprep.subr.mxu0 0.0
        %1303 = vmatpush1.xpose.msra.mxu0 0.0
        %1304 = vmatprep.subr.mxu0 0.0
        %1305 = vmatpush1.xpose.msra.mxu0 0.0
        %1306 = vmatprep.subr.mxu0 0.0
        %1307 = vmatpush1.xpose.msra.mxu0 0.0
        %1308 = vmatprep.subr.mxu0 0.0
        %1309 = vmatpush1.xpose.msra.mxu0 0.0
        %1310 = vmatprep.subr.mxu0 0.0
        %1311 = vmatpush1.xpose.msra.mxu0 0.0
        %1312 = vmatprep.subr.mxu0 0.0
        %1313 = vmatpush1.xpose.msra.mxu0 0.0
        %1314 = vmatprep.mubr.f32.mxu0 0.0
        %1315 = vmatmul.mubr.f32.gmra.mrb[0].mxu0 %v1218
        %v1316 = vpop.f32.mrb[0].mxu0
        %v1317 = vadd.f32 0.0, %v1316
        %v1318 = vpop.f32.mrb[0].mxu0
        %1319 = vmatprep.mubr.f32.mxu0 0.0
        %1320 = vmatmul.mubr.f32.gmra.mrb[0].mxu0 %v1220
        %v1321 = vpop.f32.mrb[0].mxu0
        %v1322 = vadd.f32 0.0, %v1321
        %v1323 = vpop.f32.mrb[0].mxu0
        %1324 = vmatprep.mubr.f32.mxu0 0.0
        %1325 = vmatmul.mubr.f32.gmra.mrb[0].mxu0 %v1222
        %v1326 = vpop.f32.mrb[0].mxu0
        %v1327 = vadd.f32 0.0, %v1326
        %v1328 = vpop.f32.mrb[0].mxu0
        %1329 = vmatprep.mubr.f32.mxu0 0.0
        %1330 = vmatmul.mubr.f32.gmra.mrb[0].mxu0 %v1224
        %v1331 = vpop.f32.mrb[0].mxu0
        %v1332 = vadd.f32 0.0, %v1331
        %v1333 = vpop.f32.mrb[0].mxu0
        %1334 = vmatprep.mubr.f32.mxu0 0.0
        %1335 = vmatmul.mubr.f32.gmra.mrb[0].mxu0 %v1226
        %v1336 = vpop.f32.mrb[0].mxu0
        %v1337 = vadd.f32 0.0, %v1336
        %v1338 = vpop.f32.mrb[0].mxu0
        %1339 = vmatprep.mubr.f32.mxu0 0.0
        %1340 = vmatmul.mubr.f32.gmra.mrb[0].mxu0 %v1228
        %v1341 = vpop.f32.mrb[0].mxu0
        %v1342 = vadd.f32 0.0, %v1341
        %v1343 = vpop.f32.mrb[0].mxu0
        %1344 = vmatprep.mubr.f32.mxu0 0.0
        %1345 = vmatmul.mubr.f32.gmra.mrb[0].mxu0 %v1230
        %v1346 = vpop.f32.mrb[0].mxu0
        %v1347 = vadd.f32 0.0, %v1346
        %v1348 = vpop.f32.mrb[0].mxu0
        %1349 = vmatprep.mubr.f32.mxu0 0.0
        %1350 = vmatmul.mubr.f32.gmra.mrb[0].mxu0 %v1232
        %v1351 = vpop.f32.mrb[0].mxu0
        %v1352 = vadd.f32 0.0, %v1351
        %v1353 = vpop.f32.mrb[0].mxu0
        %1354 = vdwg.mxu0
        %1363 = vrot.lane.b32.xlu0 %v825, 64
        %v1364 = vpop.permute.xlu0 %1363
        %1365 = vrot.lane.b32.xlu0 %v831, 64
        %v1366 = vpop.permute.xlu0 %1365
        %1367 = vrot.lane.b32.xlu0 %v837, 64
        %v1368 = vpop.permute.xlu0 %1367
        %1369 = vrot.lane.b32.xlu0 %v843, 64
        %v1370 = vpop.permute.xlu0 %1369
        %1371 = vrot.lane.b32.xlu0 %v849, 64
        %v1372 = vpop.permute.xlu0 %1371
        %1373 = vrot.lane.b32.xlu0 %v855, 64
        %v1374 = vpop.permute.xlu0 %1373
        %1375 = vrot.lane.b32.xlu0 %v861, 64
        %v1376 = vpop.permute.xlu0 %1375
        %1377 = vrot.lane.b32.xlu0 %v867, 64
        %v1378 = vpop.permute.xlu0 %1377
        %v1379 = vsel %vm895, %v825, 0
        %v1381 = vsel %vm895, %v831, 0
        %v1383 = vsel %vm895, %v837, 0
        %v1385 = vsel %vm895, %v843, 0
        %v1387 = vsel %vm895, %v849, 0
        %v1389 = vsel %vm895, %v855, 0
        %v1391 = vsel %vm895, %v861, 0
        %v1393 = vsel %vm895, %v867, 0
        %v1395 = vsel %vm895, %v1364, 0
        %v1397 = vsel %vm895, %v1366, 0
        %v1399 = vsel %vm895, %v1368, 0
        %v1401 = vsel %vm895, %v1370, 0
        %v1403 = vsel %vm895, %v1372, 0
        %v1405 = vsel %vm895, %v1374, 0
        %v1407 = vsel %vm895, %v1376, 0
        %v1409 = vsel %vm895, %v1378, 0
        %1411 = vmatprep.subr.mxu0 0.0
        %1412 = vmatpush1.xpose.msra.mxu0 %v1395
        %1413 = vmatprep.subr.mxu0 0.0
        %1414 = vmatpush1.xpose.msra.mxu0 %v1397
        %1415 = vmatprep.subr.mxu0 0.0
        %1416 = vmatpush1.xpose.msra.mxu0 %v1399
        %1417 = vmatprep.subr.mxu0 0.0
        %1418 = vmatpush1.xpose.msra.mxu0 %v1401
        %1419 = vmatprep.subr.mxu0 0.0
        %1420 = vmatpush1.xpose.msra.mxu0 %v1403
        %1421 = vmatprep.subr.mxu0 0.0
        %1422 = vmatpush1.xpose.msra.mxu0 %v1405
        %1423 = vmatprep.subr.mxu0 0.0
        %1424 = vmatpush1.xpose.msra.mxu0 %v1407
        %1425 = vmatprep.subr.mxu0 0.0
        %1426 = vmatpush1.xpose.msra.mxu0 %v1409
        %1427 = vmatprep.subr.mxu0 0.0
        %1428 = vmatpush1.xpose.msra.mxu0 0.0
        %1429 = vmatprep.subr.mxu0 0.0
        %1430 = vmatpush1.xpose.msra.mxu0 0.0
        %1431 = vmatprep.subr.mxu0 0.0
        %1432 = vmatpush1.xpose.msra.mxu0 0.0
        %1433 = vmatprep.subr.mxu0 0.0
        %1434 = vmatpush1.xpose.msra.mxu0 0.0
        %1435 = vmatprep.subr.mxu0 0.0
        %1436 = vmatpush1.xpose.msra.mxu0 0.0
        %1437 = vmatprep.subr.mxu0 0.0
        %1438 = vmatpush1.xpose.msra.mxu0 0.0
        %1439 = vmatprep.subr.mxu0 0.0
        %1440 = vmatpush1.xpose.msra.mxu0 0.0
        %1441 = vmatprep.subr.mxu0 0.0
        %1442 = vmatpush1.xpose.msra.mxu0 0.0
        %1443 = vmatprep.subr.mxu0 0.0
        %1444 = vmatpush1.xpose.msra.mxu0 0.0
        %1445 = vmatprep.subr.mxu0 0.0
        %1446 = vmatpush1.xpose.msra.mxu0 0.0
        %1447 = vmatprep.subr.mxu0 0.0
        %1448 = vmatpush1.xpose.msra.mxu0 0.0
        %1449 = vmatprep.subr.mxu0 0.0
        %1450 = vmatpush1.xpose.msra.mxu0 0.0
        %1451 = vmatprep.subr.mxu0 0.0
        %1452 = vmatpush1.xpose.msra.mxu0 0.0
        %1453 = vmatprep.subr.mxu0 0.0
        %1454 = vmatpush1.xpose.msra.mxu0 0.0
        %1455 = vmatprep.subr.mxu0 0.0
        %1456 = vmatpush1.xpose.msra.mxu0 0.0
        %1457 = vmatprep.subr.mxu0 0.0
        %1458 = vmatpush1.xpose.msra.mxu0 0.0
        %1459 = vmatprep.subr.mxu0 0.0
        %1460 = vmatpush1.xpose.msra.mxu0 0.0
        %1461 = vmatprep.subr.mxu0 0.0
        %1462 = vmatpush1.xpose.msra.mxu0 0.0
        %1463 = vmatprep.subr.mxu0 0.0
        %1464 = vmatpush1.xpose.msra.mxu0 0.0
        %1465 = vmatprep.subr.mxu0 0.0
        %1466 = vmatpush1.xpose.msra.mxu0 0.0
        %1467 = vmatprep.subr.mxu0 0.0
        %1468 = vmatpush1.xpose.msra.mxu0 0.0
        %1469 = vmatprep.subr.mxu0 0.0
        %1470 = vmatpush1.xpose.msra.mxu0 0.0
        %1471 = vmatprep.subr.mxu0 0.0
        %1472 = vmatpush1.xpose.msra.mxu0 0.0
        %1473 = vmatprep.subr.mxu0 0.0
        %1474 = vmatpush1.xpose.msra.mxu0 0.0
        %1475 = vmatprep.mubr.f32.mxu0 0.0
        %1476 = vmatmul.mubr.f32.gmra.mrb[0].mxu0 %v1379
        %v1477 = vpop.f32.mrb[0].mxu0
        %v1478 = vadd.f32 0.0, %v1477
        %v1479 = vpop.f32.mrb[0].mxu0
        %1480 = vmatprep.mubr.f32.mxu0 0.0
        %1481 = vmatmul.mubr.f32.gmra.mrb[0].mxu0 %v1381
        %v1482 = vpop.f32.mrb[0].mxu0
        %v1483 = vadd.f32 0.0, %v1482
        %v1484 = vpop.f32.mrb[0].mxu0
        %1485 = vmatprep.mubr.f32.mxu0 0.0
        %1486 = vmatmul.mubr.f32.gmra.mrb[0].mxu0 %v1383
        %v1487 = vpop.f32.mrb[0].mxu0
        %v1488 = vadd.f32 0.0, %v1487
        %v1489 = vpop.f32.mrb[0].mxu0
        %1490 = vmatprep.mubr.f32.mxu0 0.0
        %1491 = vmatmul.mubr.f32.gmra.mrb[0].mxu0 %v1385
        %v1492 = vpop.f32.mrb[0].mxu0
        %v1493 = vadd.f32 0.0, %v1492
        %v1494 = vpop.f32.mrb[0].mxu0
        %1495 = vmatprep.mubr.f32.mxu0 0.0
        %1496 = vmatmul.mubr.f32.gmra.mrb[0].mxu0 %v1387
        %v1497 = vpop.f32.mrb[0].mxu0
        %v1498 = vadd.f32 0.0, %v1497
        %v1499 = vpop.f32.mrb[0].mxu0
        %1500 = vmatprep.mubr.f32.mxu0 0.0
        %1501 = vmatmul.mubr.f32.gmra.mrb[0].mxu0 %v1389
        %v1502 = vpop.f32.mrb[0].mxu0
        %v1503 = vadd.f32 0.0, %v1502
        %v1504 = vpop.f32.mrb[0].mxu0
        %1505 = vmatprep.mubr.f32.mxu0 0.0
        %1506 = vmatmul.mubr.f32.gmra.mrb[0].mxu0 %v1391
        %v1507 = vpop.f32.mrb[0].mxu0
        %v1508 = vadd.f32 0.0, %v1507
        %v1509 = vpop.f32.mrb[0].mxu0
        %1510 = vmatprep.mubr.f32.mxu0 0.0
        %1511 = vmatmul.mubr.f32.gmra.mrb[0].mxu0 %v1393
        %v1512 = vpop.f32.mrb[0].mxu0
        %v1513 = vadd.f32 0.0, %v1512
        %v1514 = vpop.f32.mrb[0].mxu0
        %1515 = vdwg.mxu0
        %v1516 = vlaneseq
        %v1517 = vshrl.u32 %v1516, 7
        %v1518 = vadd.s32 %v1517, 8
        %v1519 = vadd.s32 %v1517, 16
        %v1520 = vadd.s32 %v1517, 24
        %v1521 = vadd.s32 %v1517, 32
        %v1522 = vadd.s32 %v1517, 40
        %v1523 = vadd.s32 %v1517, 48
        %v1524 = vadd.s32 %v1517, 56
        %v1525 = vlaneseq
        %v1526 = vand.u32 %v1525, 127
        %vm1527 = vcmp.le.s32.totalorder %v1526, %v1517
        %vm1528 = vcmp.le.s32.totalorder %v1526, %v1518
        %vm1529 = vcmp.le.s32.totalorder %v1526, %v1519
        %vm1530 = vcmp.le.s32.totalorder %v1526, %v1520
        %vm1531 = vcmp.le.s32.totalorder %v1526, %v1521
        %vm1532 = vcmp.le.s32.totalorder %v1526, %v1522
        %vm1533 = vcmp.le.s32.totalorder %v1526, %v1523
        %vm1534 = vcmp.le.s32.totalorder %v1526, %v1524
        %v1535 = vsel %vm1527, 1, 0
        %v1536 = vsel %vm1528, 1, 0
        %v1537 = vsel %vm1529, 1, 0
        %v1538 = vsel %vm1530, 1, 0
        %v1539 = vsel %vm1531, 1, 0
        %v1540 = vsel %vm1532, 1, 0
        %v1541 = vsel %vm1533, 1, 0
        %v1542 = vsel %vm1534, 1, 0
        %vm1543 = vcmp.eq.s32.totalorder %v1535, 1
        %vm1544 = vcmp.eq.s32.totalorder %v1536, 1
        %vm1545 = vcmp.eq.s32.totalorder %v1537, 1
        %vm1546 = vcmp.eq.s32.totalorder %v1538, 1
        %vm1547 = vcmp.eq.s32.totalorder %v1539, 1
        %vm1548 = vcmp.eq.s32.totalorder %v1540, 1
        %vm1549 = vcmp.eq.s32.totalorder %v1541, 1
        %vm1550 = vcmp.eq.s32.totalorder %v1542, 1
        %v1551 = vsel %vm1543, %v995, -inf
        %v1552 = vsel %vm1544, %v1000, -inf
        %v1553 = vsel %vm1545, %v1005, -inf
        %v1554 = vsel %vm1546, %v1010, -inf
        %v1555 = vsel %vm1547, %v1015, -inf
        %v1556 = vsel %vm1548, %v1020, -inf
        %v1557 = vsel %vm1549, %v1025, -inf
        %v1558 = vsel %vm1550, %v1030, -inf
        %v1559 = vsel %vm1543, %v1156, -inf
        %v1560 = vsel %vm1544, %v1161, -inf
        %v1561 = vsel %vm1545, %v1166, -inf
        %v1562 = vsel %vm1546, %v1171, -inf
        %v1563 = vsel %vm1547, %v1176, -inf
        %v1564 = vsel %vm1548, %v1181, -inf
        %v1565 = vsel %vm1549, %v1186, -inf
        %v1566 = vsel %vm1550, %v1191, -inf
        %v1567 = vsel %vm1543, %v1317, -inf
        %v1568 = vsel %vm1544, %v1322, -inf
        %v1569 = vsel %vm1545, %v1327, -inf
        %v1570 = vsel %vm1546, %v1332, -inf
        %v1571 = vsel %vm1547, %v1337, -inf
        %v1572 = vsel %vm1548, %v1342, -inf
        %v1573 = vsel %vm1549, %v1347, -inf
        %v1574 = vsel %vm1550, %v1352, -inf
        %v1575 = vsel %vm1543, %v1478, -inf
        %v1576 = vsel %vm1544, %v1483, -inf
        %v1577 = vsel %vm1545, %v1488, -inf
        %v1578 = vsel %vm1546, %v1493, -inf
        %v1579 = vsel %vm1547, %v1498, -inf
        %v1580 = vsel %vm1548, %v1503, -inf
        %v1581 = vsel %vm1549, %v1508, -inf
        %v1582 = vsel %vm1550, %v1513, -inf
        %v1583 = vsel %vm895, %v1551, -inf
        %1584 = vmax.xlane.f32.xlu0 %v1583
        %v1585 = vpop.xlane.xlu0 %1584
        %v1586 = vsel %vm895, %v1552, -inf
        %1587 = vmax.xlane.f32.xlu0 %v1586
        %v1588 = vpop.xlane.xlu0 %1587
        %v1589 = vsel %vm895, %v1553, -inf
        %1590 = vmax.xlane.f32.xlu0 %v1589
        %v1591 = vpop.xlane.xlu0 %1590
        %v1592 = vsel %vm895, %v1554, -inf
        %1593 = vmax.xlane.f32.xlu0 %v1592
        %v1594 = vpop.xlane.xlu0 %1593
        %v1595 = vsel %vm895, %v1555, -inf
        %1596 = vmax.xlane.f32.xlu0 %v1595
        %v1597 = vpop.xlane.xlu0 %1596
        %v1598 = vsel %vm895, %v1556, -inf
        %1599 = vmax.xlane.f32.xlu0 %v1598
        %v1600 = vpop.xlane.xlu0 %1599
        %v1601 = vsel %vm895, %v1557, -inf
        %1602 = vmax.xlane.f32.xlu0 %v1601
        %v1603 = vpop.xlane.xlu0 %1602
        %v1604 = vsel %vm895, %v1558, -inf
        %1605 = vmax.xlane.f32.xlu0 %v1604
        %v1606 = vpop.xlane.xlu0 %1605
        %v1607 = vsel %vm895, %v1559, -inf
        %1608 = vmax.xlane.f32.xlu0 %v1607
        %v1609 = vpop.xlane.xlu0 %1608
        %v1610 = vsel %vm895, %v1560, -inf
        %1611 = vmax.xlane.f32.xlu0 %v1610
        %v1612 = vpop.xlane.xlu0 %1611
        %v1613 = vsel %vm895, %v1561, -inf
        %1614 = vmax.xlane.f32.xlu0 %v1613
        %v1615 = vpop.xlane.xlu0 %1614
        %v1616 = vsel %vm895, %v1562, -inf
        %1617 = vmax.xlane.f32.xlu0 %v1616
        %v1618 = vpop.xlane.xlu0 %1617
        %v1619 = vsel %vm895, %v1563, -inf
        %1620 = vmax.xlane.f32.xlu0 %v1619
        %v1621 = vpop.xlane.xlu0 %1620
        %v1622 = vsel %vm895, %v1564, -inf
        %1623 = vmax.xlane.f32.xlu0 %v1622
        %v1624 = vpop.xlane.xlu0 %1623
        %v1625 = vsel %vm895, %v1565, -inf
        %1626 = vmax.xlane.f32.xlu0 %v1625
        %v1627 = vpop.xlane.xlu0 %1626
        %v1628 = vsel %vm895, %v1566, -inf
        %1629 = vmax.xlane.f32.xlu0 %v1628
        %v1630 = vpop.xlane.xlu0 %1629
        %v1631 = vsel %vm895, %v1567, -inf
        %1632 = vmax.xlane.f32.xlu0 %v1631
        %v1633 = vpop.xlane.xlu0 %1632
        %v1634 = vsel %vm895, %v1568, -inf
        %1635 = vmax.xlane.f32.xlu0 %v1634
        %v1636 = vpop.xlane.xlu0 %1635
        %v1637 = vsel %vm895, %v1569, -inf
        %1638 = vmax.xlane.f32.xlu0 %v1637
        %v1639 = vpop.xlane.xlu0 %1638
        %v1640 = vsel %vm895, %v1570, -inf
        %1641 = vmax.xlane.f32.xlu0 %v1640
        %v1642 = vpop.xlane.xlu0 %1641
        %v1643 = vsel %vm895, %v1571, -inf
        %1644 = vmax.xlane.f32.xlu0 %v1643
        %v1645 = vpop.xlane.xlu0 %1644
        %v1646 = vsel %vm895, %v1572, -inf
        %1647 = vmax.xlane.f32.xlu0 %v1646
        %v1648 = vpop.xlane.xlu0 %1647
        %v1649 = vsel %vm895, %v1573, -inf
        %1650 = vmax.xlane.f32.xlu0 %v1649
        %v1651 = vpop.xlane.xlu0 %1650
        %v1652 = vsel %vm895, %v1574, -inf
        %1653 = vmax.xlane.f32.xlu0 %v1652
        %v1654 = vpop.xlane.xlu0 %1653
        %v1655 = vsel %vm895, %v1575, -inf
        %1656 = vmax.xlane.f32.xlu0 %v1655
        %v1657 = vpop.xlane.xlu0 %1656
        %v1658 = vsel %vm895, %v1576, -inf
        %1659 = vmax.xlane.f32.xlu0 %v1658
        %v1660 = vpop.xlane.xlu0 %1659
        %v1661 = vsel %vm895, %v1577, -inf
        %1662 = vmax.xlane.f32.xlu0 %v1661
        %v1663 = vpop.xlane.xlu0 %1662
        %v1664 = vsel %vm895, %v1578, -inf
        %1665 = vmax.xlane.f32.xlu0 %v1664
        %v1666 = vpop.xlane.xlu0 %1665
        %v1667 = vsel %vm895, %v1579, -inf
        %1668 = vmax.xlane.f32.xlu0 %v1667
        %v1669 = vpop.xlane.xlu0 %1668
        %v1670 = vsel %vm895, %v1580, -inf
        %1671 = vmax.xlane.f32.xlu0 %v1670
        %v1672 = vpop.xlane.xlu0 %1671
        %v1673 = vsel %vm895, %v1581, -inf
        %1674 = vmax.xlane.f32.xlu0 %v1673
        %v1675 = vpop.xlane.xlu0 %1674
        %v1676 = vsel %vm895, %v1582, -inf
        %1677 = vmax.xlane.f32.xlu0 %v1676
        %v1678 = vpop.xlane.xlu0 %1677
        %v1679 = vsub.f32 %v1551, %v1585
        %v1680 = vsub.f32 %v1552, %v1588
        %v1681 = vsub.f32 %v1553, %v1591
        %v1682 = vsub.f32 %v1554, %v1594
        %v1683 = vsub.f32 %v1555, %v1597
        %v1684 = vsub.f32 %v1556, %v1600
        %v1685 = vsub.f32 %v1557, %v1603
        %v1686 = vsub.f32 %v1558, %v1606
        %v1687 = vsub.f32 %v1559, %v1609
        %v1688 = vsub.f32 %v1560, %v1612
        %v1689 = vsub.f32 %v1561, %v1615
        %v1690 = vsub.f32 %v1562, %v1618
        %v1691 = vsub.f32 %v1563, %v1621
        %v1692 = vsub.f32 %v1564, %v1624
        %v1693 = vsub.f32 %v1565, %v1627
        %v1694 = vsub.f32 %v1566, %v1630
        %v1695 = vsub.f32 %v1567, %v1633
        %v1696 = vsub.f32 %v1568, %v1636
        %v1697 = vsub.f32 %v1569, %v1639
        %v1698 = vsub.f32 %v1570, %v1642
        %v1699 = vsub.f32 %v1571, %v1645
        %v1700 = vsub.f32 %v1572, %v1648
        %v1701 = vsub.f32 %v1573, %v1651
        %v1702 = vsub.f32 %v1574, %v1654
        %v1703 = vsub.f32 %v1575, %v1657
        %v1704 = vsub.f32 %v1576, %v1660
        %v1705 = vsub.f32 %v1577, %v1663
        %v1706 = vsub.f32 %v1578, %v1666
        %v1707 = vsub.f32 %v1579, %v1669
        %v1708 = vsub.f32 %v1580, %v1672
        %v1709 = vsub.f32 %v1581, %v1675
        %v1710 = vsub.f32 %v1582, %v1678
        %v1711 = vmul.f32 %v1679, 1.442695
        %v1712 = vpow.pop %v1711
        %v1713 = vmul.f32 %v1680, 1.442695
        %v1714 = vpow.pop %v1713
        %v1715 = vmul.f32 %v1681, 1.442695
        %v1716 = vpow.pop %v1715
        %v1717 = vmul.f32 %v1682, 1.442695
        %v1718 = vpow.pop %v1717
        %v1719 = vmul.f32 %v1683, 1.442695
        %v1720 = vpow.pop %v1719
        %v1721 = vmul.f32 %v1684, 1.442695
        %v1722 = vpow.pop %v1721
        %v1723 = vmul.f32 %v1685, 1.442695
        %v1724 = vpow.pop %v1723
        %v1725 = vmul.f32 %v1686, 1.442695
        %v1726 = vpow.pop %v1725
        %v1727 = vmul.f32 %v1687, 1.442695
        %v1728 = vpow.pop %v1727
        %v1729 = vmul.f32 %v1688, 1.442695
        %v1730 = vpow.pop %v1729
        %v1731 = vmul.f32 %v1689, 1.442695
        %v1732 = vpow.pop %v1731
        %v1733 = vmul.f32 %v1690, 1.442695
        %v1734 = vpow.pop %v1733
        %v1735 = vmul.f32 %v1691, 1.442695
        %v1736 = vpow.pop %v1735
        %v1737 = vmul.f32 %v1692, 1.442695
        %v1738 = vpow.pop %v1737
        %v1739 = vmul.f32 %v1693, 1.442695
        %v1740 = vpow.pop %v1739
        %v1741 = vmul.f32 %v1694, 1.442695
        %v1742 = vpow.pop %v1741
        %v1743 = vmul.f32 %v1695, 1.442695
        %v1744 = vpow.pop %v1743
        %v1745 = vmul.f32 %v1696, 1.442695
        %v1746 = vpow.pop %v1745
        %v1747 = vmul.f32 %v1697, 1.442695
        %v1748 = vpow.pop %v1747
        %v1749 = vmul.f32 %v1698, 1.442695
        %v1750 = vpow.pop %v1749
        %v1751 = vmul.f32 %v1699, 1.442695
        %v1752 = vpow.pop %v1751
        %v1753 = vmul.f32 %v1700, 1.442695
        %v1754 = vpow.pop %v1753
        %v1755 = vmul.f32 %v1701, 1.442695
        %v1756 = vpow.pop %v1755
        %v1757 = vmul.f32 %v1702, 1.442695
        %v1758 = vpow.pop %v1757
        %v1759 = vmul.f32 %v1703, 1.442695
        %v1760 = vpow.pop %v1759
        %v1761 = vmul.f32 %v1704, 1.442695
        %v1762 = vpow.pop %v1761
        %v1763 = vmul.f32 %v1705, 1.442695
        %v1764 = vpow.pop %v1763
        %v1765 = vmul.f32 %v1706, 1.442695
        %v1766 = vpow.pop %v1765
        %v1767 = vmul.f32 %v1707, 1.442695
        %v1768 = vpow.pop %v1767
        %v1769 = vmul.f32 %v1708, 1.442695
        %v1770 = vpow.pop %v1769
        %v1771 = vmul.f32 %v1709, 1.442695
        %v1772 = vpow.pop %v1771
        %v1773 = vmul.f32 %v1710, 1.442695
        %v1774 = vpow.pop %v1773
        %v1775 = vsel %vm895, %v1712, 0.0
        %1776 = vadd.xlane.f32.xlu0 %v1775
        %v1777 = vpop.xlane.xlu0 %1776
        %v1778 = vsel %vm895, %v1714, 0.0
        %1779 = vadd.xlane.f32.xlu0 %v1778
        %v1780 = vpop.xlane.xlu0 %1779
        %v1781 = vsel %vm895, %v1716, 0.0
        %1782 = vadd.xlane.f32.xlu0 %v1781
        %v1783 = vpop.xlane.xlu0 %1782
        %v1784 = vsel %vm895, %v1718, 0.0
        %1785 = vadd.xlane.f32.xlu0 %v1784
        %v1786 = vpop.xlane.xlu0 %1785
        %v1787 = vsel %vm895, %v1720, 0.0
        %1788 = vadd.xlane.f32.xlu0 %v1787
        %v1789 = vpop.xlane.xlu0 %1788
        %v1790 = vsel %vm895, %v1722, 0.0
        %1791 = vadd.xlane.f32.xlu0 %v1790
        %v1792 = vpop.xlane.xlu0 %1791
        %v1793 = vsel %vm895, %v1724, 0.0
        %1794 = vadd.xlane.f32.xlu0 %v1793
        %v1795 = vpop.xlane.xlu0 %1794
        %v1796 = vsel %vm895, %v1726, 0.0
        %1797 = vadd.xlane.f32.xlu0 %v1796
        %v1798 = vpop.xlane.xlu0 %1797
        %v1799 = vsel %vm895, %v1728, 0.0
        %1800 = vadd.xlane.f32.xlu0 %v1799
        %v1801 = vpop.xlane.xlu0 %1800
        %v1802 = vsel %vm895, %v1730, 0.0
        %1803 = vadd.xlane.f32.xlu0 %v1802
        %v1804 = vpop.xlane.xlu0 %1803
        %v1805 = vsel %vm895, %v1732, 0.0
        %1806 = vadd.xlane.f32.xlu0 %v1805
        %v1807 = vpop.xlane.xlu0 %1806
        %v1808 = vsel %vm895, %v1734, 0.0
        %1809 = vadd.xlane.f32.xlu0 %v1808
        %v1810 = vpop.xlane.xlu0 %1809
        %v1811 = vsel %vm895, %v1736, 0.0
        %1812 = vadd.xlane.f32.xlu0 %v1811
        %v1813 = vpop.xlane.xlu0 %1812
        %v1814 = vsel %vm895, %v1738, 0.0
        %1815 = vadd.xlane.f32.xlu0 %v1814
        %v1816 = vpop.xlane.xlu0 %1815
        %v1817 = vsel %vm895, %v1740, 0.0
        %1818 = vadd.xlane.f32.xlu0 %v1817
        %v1819 = vpop.xlane.xlu0 %1818
        %v1820 = vsel %vm895, %v1742, 0.0
        %1821 = vadd.xlane.f32.xlu0 %v1820
        %v1822 = vpop.xlane.xlu0 %1821
        %v1823 = vsel %vm895, %v1744, 0.0
        %1824 = vadd.xlane.f32.xlu0 %v1823
        %v1825 = vpop.xlane.xlu0 %1824
        %v1826 = vsel %vm895, %v1746, 0.0
        %1827 = vadd.xlane.f32.xlu0 %v1826
        %v1828 = vpop.xlane.xlu0 %1827
        %v1829 = vsel %vm895, %v1748, 0.0
        %1830 = vadd.xlane.f32.xlu0 %v1829
        %v1831 = vpop.xlane.xlu0 %1830
        %v1832 = vsel %vm895, %v1750, 0.0
        %1833 = vadd.xlane.f32.xlu0 %v1832
        %v1834 = vpop.xlane.xlu0 %1833
        %v1835 = vsel %vm895, %v1752, 0.0
        %1836 = vadd.xlane.f32.xlu0 %v1835
        %v1837 = vpop.xlane.xlu0 %1836
        %v1838 = vsel %vm895, %v1754, 0.0
        %1839 = vadd.xlane.f32.xlu0 %v1838
        %v1840 = vpop.xlane.xlu0 %1839
        %v1841 = vsel %vm895, %v1756, 0.0
        %1842 = vadd.xlane.f32.xlu0 %v1841
        %v1843 = vpop.xlane.xlu0 %1842
        %v1844 = vsel %vm895, %v1758, 0.0
        %1845 = vadd.xlane.f32.xlu0 %v1844
        %v1846 = vpop.xlane.xlu0 %1845
        %v1847 = vsel %vm895, %v1760, 0.0
        %1848 = vadd.xlane.f32.xlu0 %v1847
        %v1849 = vpop.xlane.xlu0 %1848
        %v1850 = vsel %vm895, %v1762, 0.0
        %1851 = vadd.xlane.f32.xlu0 %v1850
        %v1852 = vpop.xlane.xlu0 %1851
        %v1853 = vsel %vm895, %v1764, 0.0
        %1854 = vadd.xlane.f32.xlu0 %v1853
        %v1855 = vpop.xlane.xlu0 %1854
        %v1856 = vsel %vm895, %v1766, 0.0
        %1857 = vadd.xlane.f32.xlu0 %v1856
        %v1858 = vpop.xlane.xlu0 %1857
        %v1859 = vsel %vm895, %v1768, 0.0
        %1860 = vadd.xlane.f32.xlu0 %v1859
        %v1861 = vpop.xlane.xlu0 %1860
        %v1862 = vsel %vm895, %v1770, 0.0
        %1863 = vadd.xlane.f32.xlu0 %v1862
        %v1864 = vpop.xlane.xlu0 %1863
        %v1865 = vsel %vm895, %v1772, 0.0
        %1866 = vadd.xlane.f32.xlu0 %v1865
        %v1867 = vpop.xlane.xlu0 %1866
        %v1868 = vsel %vm895, %v1774, 0.0
        %1869 = vadd.xlane.f32.xlu0 %v1868
        %v1870 = vpop.xlane.xlu0 %1869
        %v1871 = vrcp.pop %v1777
        %v1872 = vrcp.pop %v1780
        %v1873 = vrcp.pop %v1783
        %v1874 = vrcp.pop %v1786
        %v1875 = vrcp.pop %v1789
        %v1876 = vrcp.pop %v1792
        %v1877 = vrcp.pop %v1795
        %v1878 = vrcp.pop %v1798
        %v1879 = vrcp.pop %v1801
        %v1880 = vrcp.pop %v1804
        %v1881 = vrcp.pop %v1807
        %v1882 = vrcp.pop %v1810
        %v1883 = vrcp.pop %v1813
        %v1884 = vrcp.pop %v1816
        %v1885 = vrcp.pop %v1819
        %v1886 = vrcp.pop %v1822
        %v1887 = vrcp.pop %v1825
        %v1888 = vrcp.pop %v1828
        %v1889 = vrcp.pop %v1831
        %v1890 = vrcp.pop %v1834
        %v1891 = vrcp.pop %v1837
        %v1892 = vrcp.pop %v1840
        %v1893 = vrcp.pop %v1843
        %v1894 = vrcp.pop %v1846
        %v1895 = vrcp.pop %v1849
        %v1896 = vrcp.pop %v1852
        %v1897 = vrcp.pop %v1855
        %v1898 = vrcp.pop %v1858
        %v1899 = vrcp.pop %v1861
        %v1900 = vrcp.pop %v1864
        %v1901 = vrcp.pop %v1867
        %v1902 = vrcp.pop %v1870
        %v1904 = vsel %vm895, %v1712, 0
        %v1907 = vsel %vm895, %v1714, 0
        %v1910 = vsel %vm895, %v1716, 0
        %v1913 = vsel %vm895, %v1718, 0
        %v1916 = vsel %vm895, %v1720, 0
        %v1919 = vsel %vm895, %v1722, 0
        %v1922 = vsel %vm895, %v1724, 0
        %v1925 = vsel %vm895, %v1726, 0
        %1927 = vmatprep.subr.mxu0 0.0
        %1928 = vmatpush1.msra.mxu0 %v683
        %1929 = vmatprep.subr.mxu0 0.0
        %1930 = vmatpush1.msra.mxu0 %v689
        %1931 = vmatprep.subr.mxu0 0.0
        %1932 = vmatpush1.msra.mxu0 %v695
        %1933 = vmatprep.subr.mxu0 0.0
        %1934 = vmatpush1.msra.mxu0 %v701
        %1935 = vmatprep.subr.mxu0 0.0
        %1936 = vmatpush1.msra.mxu0 %v707
        %1937 = vmatprep.subr.mxu0 0.0
        %1938 = vmatpush1.msra.mxu0 %v713
        %1939 = vmatprep.subr.mxu0 0.0
        %1940 = vmatpush1.msra.mxu0 %v719
        %1941 = vmatprep.subr.mxu0 0.0
        %1942 = vmatpush1.msra.mxu0 %v725
        %1943 = vmatprep.subr.mxu0 0.0
        %1944 = vmatpush1.msra.mxu0 0.0
        %1945 = vmatprep.subr.mxu0 0.0
        %1946 = vmatpush1.msra.mxu0 0.0
        %1947 = vmatprep.subr.mxu0 0.0
        %1948 = vmatpush1.msra.mxu0 0.0
        %1949 = vmatprep.subr.mxu0 0.0
        %1950 = vmatpush1.msra.mxu0 0.0
        %1951 = vmatprep.subr.mxu0 0.0
        %1952 = vmatpush1.msra.mxu0 0.0
        %1953 = vmatprep.subr.mxu0 0.0
        %1954 = vmatpush1.msra.mxu0 0.0
        %1955 = vmatprep.subr.mxu0 0.0
        %1956 = vmatpush1.msra.mxu0 0.0
        %1957 = vmatprep.subr.mxu0 0.0
        %1958 = vmatpush1.msra.mxu0 0.0
        %1959 = vmatprep.subr.mxu0 0.0
        %1960 = vmatpush1.msra.mxu0 0.0
        %1961 = vmatprep.subr.mxu0 0.0
        %1962 = vmatpush1.msra.mxu0 0.0
        %1963 = vmatprep.subr.mxu0 0.0
        %1964 = vmatpush1.msra.mxu0 0.0
        %1965 = vmatprep.subr.mxu0 0.0
        %1966 = vmatpush1.msra.mxu0 0.0
        %1967 = vmatprep.subr.mxu0 0.0
        %1968 = vmatpush1.msra.mxu0 0.0
        %1969 = vmatprep.subr.mxu0 0.0
        %1970 = vmatpush1.msra.mxu0 0.0
        %1971 = vmatprep.subr.mxu0 0.0
        %1972 = vmatpush1.msra.mxu0 0.0
        %1973 = vmatprep.subr.mxu0 0.0
        %1974 = vmatpush1.msra.mxu0 0.0
        %1975 = vmatprep.subr.mxu0 0.0
        %1976 = vmatpush1.msra.mxu0 0.0
        %1977 = vmatprep.subr.mxu0 0.0
        %1978 = vmatpush1.msra.mxu0 0.0
        %1979 = vmatprep.subr.mxu0 0.0
        %1980 = vmatpush1.msra.mxu0 0.0
        %1981 = vmatprep.subr.mxu0 0.0
        %1982 = vmatpush1.msra.mxu0 0.0
        %1983 = vmatprep.subr.mxu0 0.0
        %1984 = vmatpush1.msra.mxu0 0.0
        %1985 = vmatprep.subr.mxu0 0.0
        %1986 = vmatpush1.msra.mxu0 0.0
        %1987 = vmatprep.subr.mxu0 0.0
        %1988 = vmatpush1.msra.mxu0 0.0
        %1989 = vmatprep.subr.mxu0 0.0
        %1990 = vmatpush1.msra.mxu0 0.0
        %1991 = vmatprep.mubr.f32.mxu0 0.0
        %1992 = vmatmul.mubr.f32.gmra.mrb[0].mxu0 %v1904
        %v1993 = vpop.f32.mrb[0].mxu0
        %v1994 = vadd.f32 0.0, %v1993
        %v1995 = vpop.f32.mrb[0].mxu0
        %1996 = vmatprep.mubr.f32.mxu0 0.0
        %1997 = vmatmul.mubr.f32.gmra.mrb[0].mxu0 %v1907
        %v1998 = vpop.f32.mrb[0].mxu0
        %v1999 = vadd.f32 0.0, %v1998
        %v2000 = vpop.f32.mrb[0].mxu0
        %2001 = vmatprep.mubr.f32.mxu0 0.0
        %2002 = vmatmul.mubr.f32.gmra.mrb[0].mxu0 %v1910
        %v2003 = vpop.f32.mrb[0].mxu0
        %v2004 = vadd.f32 0.0, %v2003
        %v2005 = vpop.f32.mrb[0].mxu0
        %2006 = vmatprep.mubr.f32.mxu0 0.0
        %2007 = vmatmul.mubr.f32.gmra.mrb[0].mxu0 %v1913
        %v2008 = vpop.f32.mrb[0].mxu0
        %v2009 = vadd.f32 0.0, %v2008
        %v2010 = vpop.f32.mrb[0].mxu0
        %2011 = vmatprep.mubr.f32.mxu0 0.0
        %2012 = vmatmul.mubr.f32.gmra.mrb[0].mxu0 %v1916
        %v2013 = vpop.f32.mrb[0].mxu0
        %v2014 = vadd.f32 0.0, %v2013
        %v2015 = vpop.f32.mrb[0].mxu0
        %2016 = vmatprep.mubr.f32.mxu0 0.0
        %2017 = vmatmul.mubr.f32.gmra.mrb[0].mxu0 %v1919
        %v2018 = vpop.f32.mrb[0].mxu0
        %v2019 = vadd.f32 0.0, %v2018
        %v2020 = vpop.f32.mrb[0].mxu0
        %2021 = vmatprep.mubr.f32.mxu0 0.0
        %2022 = vmatmul.mubr.f32.gmra.mrb[0].mxu0 %v1922
        %v2023 = vpop.f32.mrb[0].mxu0
        %v2024 = vadd.f32 0.0, %v2023
        %v2025 = vpop.f32.mrb[0].mxu0
        %2026 = vmatprep.mubr.f32.mxu0 0.0
        %2027 = vmatmul.mubr.f32.gmra.mrb[0].mxu0 %v1925
        %v2028 = vpop.f32.mrb[0].mxu0
        %v2029 = vadd.f32 0.0, %v2028
        %v2030 = vpop.f32.mrb[0].mxu0
        %2031 = vdwg.mxu0
        %v2033 = vsel %vm895, %v1728, 0
        %v2036 = vsel %vm895, %v1730, 0
        %v2039 = vsel %vm895, %v1732, 0
        %v2042 = vsel %vm895, %v1734, 0
        %v2045 = vsel %vm895, %v1736, 0
        %v2048 = vsel %vm895, %v1738, 0
        %v2051 = vsel %vm895, %v1740, 0
        %v2054 = vsel %vm895, %v1742, 0
        %2056 = vmatprep.subr.mxu0 0.0
        %2057 = vmatpush1.msra.mxu0 %v731
        %2058 = vmatprep.subr.mxu0 0.0
        %2059 = vmatpush1.msra.mxu0 %v737
        %2060 = vmatprep.subr.mxu0 0.0
        %2061 = vmatpush1.msra.mxu0 %v743
        %2062 = vmatprep.subr.mxu0 0.0
        %2063 = vmatpush1.msra.mxu0 %v749
        %2064 = vmatprep.subr.mxu0 0.0
        %2065 = vmatpush1.msra.mxu0 %v755
        %2066 = vmatprep.subr.mxu0 0.0
        %2067 = vmatpush1.msra.mxu0 %v761
        %2068 = vmatprep.subr.mxu0 0.0
        %2069 = vmatpush1.msra.mxu0 %v767
        %2070 = vmatprep.subr.mxu0 0.0
        %2071 = vmatpush1.msra.mxu0 %v773
        %2072 = vmatprep.subr.mxu0 0.0
        %2073 = vmatpush1.msra.mxu0 0.0
        %2074 = vmatprep.subr.mxu0 0.0
        %2075 = vmatpush1.msra.mxu0 0.0
        %2076 = vmatprep.subr.mxu0 0.0
        %2077 = vmatpush1.msra.mxu0 0.0
        %2078 = vmatprep.subr.mxu0 0.0
        %2079 = vmatpush1.msra.mxu0 0.0
        %2080 = vmatprep.subr.mxu0 0.0
        %2081 = vmatpush1.msra.mxu0 0.0
        %2082 = vmatprep.subr.mxu0 0.0
        %2083 = vmatpush1.msra.mxu0 0.0
        %2084 = vmatprep.subr.mxu0 0.0
        %2085 = vmatpush1.msra.mxu0 0.0
        %2086 = vmatprep.subr.mxu0 0.0
        %2087 = vmatpush1.msra.mxu0 0.0
        %2088 = vmatprep.subr.mxu0 0.0
        %2089 = vmatpush1.msra.mxu0 0.0
        %2090 = vmatprep.subr.mxu0 0.0
        %2091 = vmatpush1.msra.mxu0 0.0
        %2092 = vmatprep.subr.mxu0 0.0
        %2093 = vmatpush1.msra.mxu0 0.0
        %2094 = vmatprep.subr.mxu0 0.0
        %2095 = vmatpush1.msra.mxu0 0.0
        %2096 = vmatprep.subr.mxu0 0.0
        %2097 = vmatpush1.msra.mxu0 0.0
        %2098 = vmatprep.subr.mxu0 0.0
        %2099 = vmatpush1.msra.mxu0 0.0
        %2100 = vmatprep.subr.mxu0 0.0
        %2101 = vmatpush1.msra.mxu0 0.0
        %2102 = vmatprep.subr.mxu0 0.0
        %2103 = vmatpush1.msra.mxu0 0.0
        %2104 = vmatprep.subr.mxu0 0.0
        %2105 = vmatpush1.msra.mxu0 0.0
        %2106 = vmatprep.subr.mxu0 0.0
        %2107 = vmatpush1.msra.mxu0 0.0
        %2108 = vmatprep.subr.mxu0 0.0
        %2109 = vmatpush1.msra.mxu0 0.0
        %2110 = vmatprep.subr.mxu0 0.0
        %2111 = vmatpush1.msra.mxu0 0.0
        %2112 = vmatprep.subr.mxu0 0.0
        %2113 = vmatpush1.msra.mxu0 0.0
        %2114 = vmatprep.subr.mxu0 0.0
        %2115 = vmatpush1.msra.mxu0 0.0
        %2116 = vmatprep.subr.mxu0 0.0
        %2117 = vmatpush1.msra.mxu0 0.0
        %2118 = vmatprep.subr.mxu0 0.0
        %2119 = vmatpush1.msra.mxu0 0.0
        %2120 = vmatprep.mubr.f32.mxu0 0.0
        %2121 = vmatmul.mubr.f32.gmra.mrb[0].mxu0 %v2033
        %v2122 = vpop.f32.mrb[0].mxu0
        %v2123 = vadd.f32 0.0, %v2122
        %v2124 = vpop.f32.mrb[0].mxu0
        %2125 = vmatprep.mubr.f32.mxu0 0.0
        %2126 = vmatmul.mubr.f32.gmra.mrb[0].mxu0 %v2036
        %v2127 = vpop.f32.mrb[0].mxu0
        %v2128 = vadd.f32 0.0, %v2127
        %v2129 = vpop.f32.mrb[0].mxu0
        %2130 = vmatprep.mubr.f32.mxu0 0.0
        %2131 = vmatmul.mubr.f32.gmra.mrb[0].mxu0 %v2039
        %v2132 = vpop.f32.mrb[0].mxu0
        %v2133 = vadd.f32 0.0, %v2132
        %v2134 = vpop.f32.mrb[0].mxu0
        %2135 = vmatprep.mubr.f32.mxu0 0.0
        %2136 = vmatmul.mubr.f32.gmra.mrb[0].mxu0 %v2042
        %v2137 = vpop.f32.mrb[0].mxu0
        %v2138 = vadd.f32 0.0, %v2137
        %v2139 = vpop.f32.mrb[0].mxu0
        %2140 = vmatprep.mubr.f32.mxu0 0.0
        %2141 = vmatmul.mubr.f32.gmra.mrb[0].mxu0 %v2045
        %v2142 = vpop.f32.mrb[0].mxu0
        %v2143 = vadd.f32 0.0, %v2142
        %v2144 = vpop.f32.mrb[0].mxu0
        %2145 = vmatprep.mubr.f32.mxu0 0.0
        %2146 = vmatmul.mubr.f32.gmra.mrb[0].mxu0 %v2048
        %v2147 = vpop.f32.mrb[0].mxu0
        %v2148 = vadd.f32 0.0, %v2147
        %v2149 = vpop.f32.mrb[0].mxu0
        %2150 = vmatprep.mubr.f32.mxu0 0.0
        %2151 = vmatmul.mubr.f32.gmra.mrb[0].mxu0 %v2051
        %v2152 = vpop.f32.mrb[0].mxu0
        %v2153 = vadd.f32 0.0, %v2152
        %v2154 = vpop.f32.mrb[0].mxu0
        %2155 = vmatprep.mubr.f32.mxu0 0.0
        %2156 = vmatmul.mubr.f32.gmra.mrb[0].mxu0 %v2054
        %v2157 = vpop.f32.mrb[0].mxu0
        %v2158 = vadd.f32 0.0, %v2157
        %v2159 = vpop.f32.mrb[0].mxu0
        %2160 = vdwg.mxu0
        %v2162 = vsel %vm895, %v1744, 0
        %v2165 = vsel %vm895, %v1746, 0
        %v2168 = vsel %vm895, %v1748, 0
        %v2171 = vsel %vm895, %v1750, 0
        %v2174 = vsel %vm895, %v1752, 0
        %v2177 = vsel %vm895, %v1754, 0
        %v2180 = vsel %vm895, %v1756, 0
        %v2183 = vsel %vm895, %v1758, 0
        %2185 = vmatprep.subr.mxu0 0.0
        %2186 = vmatpush1.msra.mxu0 %v779
        %2187 = vmatprep.subr.mxu0 0.0
        %2188 = vmatpush1.msra.mxu0 %v785
        %2189 = vmatprep.subr.mxu0 0.0
        %2190 = vmatpush1.msra.mxu0 %v791
        %2191 = vmatprep.subr.mxu0 0.0
        %2192 = vmatpush1.msra.mxu0 %v797
        %2193 = vmatprep.subr.mxu0 0.0
        %2194 = vmatpush1.msra.mxu0 %v803
        %2195 = vmatprep.subr.mxu0 0.0
        %2196 = vmatpush1.msra.mxu0 %v809
        %2197 = vmatprep.subr.mxu0 0.0
        %2198 = vmatpush1.msra.mxu0 %v815
        %2199 = vmatprep.subr.mxu0 0.0
        %2200 = vmatpush1.msra.mxu0 %v821
        %2201 = vmatprep.subr.mxu0 0.0
        %2202 = vmatpush1.msra.mxu0 0.0
        %2203 = vmatprep.subr.mxu0 0.0
        %2204 = vmatpush1.msra.mxu0 0.0
        %2205 = vmatprep.subr.mxu0 0.0
        %2206 = vmatpush1.msra.mxu0 0.0
        %2207 = vmatprep.subr.mxu0 0.0
        %2208 = vmatpush1.msra.mxu0 0.0
        %2209 = vmatprep.subr.mxu0 0.0
        %2210 = vmatpush1.msra.mxu0 0.0
        %2211 = vmatprep.subr.mxu0 0.0
        %2212 = vmatpush1.msra.mxu0 0.0
        %2213 = vmatprep.subr.mxu0 0.0
        %2214 = vmatpush1.msra.mxu0 0.0
        %2215 = vmatprep.subr.mxu0 0.0
        %2216 = vmatpush1.msra.mxu0 0.0
        %2217 = vmatprep.subr.mxu0 0.0
        %2218 = vmatpush1.msra.mxu0 0.0
        %2219 = vmatprep.subr.mxu0 0.0
        %2220 = vmatpush1.msra.mxu0 0.0
        %2221 = vmatprep.subr.mxu0 0.0
        %2222 = vmatpush1.msra.mxu0 0.0
        %2223 = vmatprep.subr.mxu0 0.0
        %2224 = vmatpush1.msra.mxu0 0.0
        %2225 = vmatprep.subr.mxu0 0.0
        %2226 = vmatpush1.msra.mxu0 0.0
        %2227 = vmatprep.subr.mxu0 0.0
        %2228 = vmatpush1.msra.mxu0 0.0
        %2229 = vmatprep.subr.mxu0 0.0
        %2230 = vmatpush1.msra.mxu0 0.0
        %2231 = vmatprep.subr.mxu0 0.0
        %2232 = vmatpush1.msra.mxu0 0.0
        %2233 = vmatprep.subr.mxu0 0.0
        %2234 = vmatpush1.msra.mxu0 0.0
        %2235 = vmatprep.subr.mxu0 0.0
        %2236 = vmatpush1.msra.mxu0 0.0
        %2237 = vmatprep.subr.mxu0 0.0
        %2238 = vmatpush1.msra.mxu0 0.0
        %2239 = vmatprep.subr.mxu0 0.0
        %2240 = vmatpush1.msra.mxu0 0.0
        %2241 = vmatprep.subr.mxu0 0.0
        %2242 = vmatpush1.msra.mxu0 0.0
        %2243 = vmatprep.subr.mxu0 0.0
        %2244 = vmatpush1.msra.mxu0 0.0
        %2245 = vmatprep.subr.mxu0 0.0
        %2246 = vmatpush1.msra.mxu0 0.0
        %2247 = vmatprep.subr.mxu0 0.0
        %2248 = vmatpush1.msra.mxu0 0.0
        %2249 = vmatprep.mubr.f32.mxu0 0.0
        %2250 = vmatmul.mubr.f32.gmra.mrb[0].mxu0 %v2162
        %v2251 = vpop.f32.mrb[0].mxu0
        %v2252 = vadd.f32 0.0, %v2251
        %v2253 = vpop.f32.mrb[0].mxu0
        %2254 = vmatprep.mubr.f32.mxu0 0.0
        %2255 = vmatmul.mubr.f32.gmra.mrb[0].mxu0 %v2165
        %v2256 = vpop.f32.mrb[0].mxu0
        %v2257 = vadd.f32 0.0, %v2256
        %v2258 = vpop.f32.mrb[0].mxu0
        %2259 = vmatprep.mubr.f32.mxu0 0.0
        %2260 = vmatmul.mubr.f32.gmra.mrb[0].mxu0 %v2168
        %v2261 = vpop.f32.mrb[0].mxu0
        %v2262 = vadd.f32 0.0, %v2261
        %v2263 = vpop.f32.mrb[0].mxu0
        %2264 = vmatprep.mubr.f32.mxu0 0.0
        %2265 = vmatmul.mubr.f32.gmra.mrb[0].mxu0 %v2171
        %v2266 = vpop.f32.mrb[0].mxu0
        %v2267 = vadd.f32 0.0, %v2266
        %v2268 = vpop.f32.mrb[0].mxu0
        %2269 = vmatprep.mubr.f32.mxu0 0.0
        %2270 = vmatmul.mubr.f32.gmra.mrb[0].mxu0 %v2174
        %v2271 = vpop.f32.mrb[0].mxu0
        %v2272 = vadd.f32 0.0, %v2271
        %v2273 = vpop.f32.mrb[0].mxu0
        %2274 = vmatprep.mubr.f32.mxu0 0.0
        %2275 = vmatmul.mubr.f32.gmra.mrb[0].mxu0 %v2177
        %v2276 = vpop.f32.mrb[0].mxu0
        %v2277 = vadd.f32 0.0, %v2276
        %v2278 = vpop.f32.mrb[0].mxu0
        %2279 = vmatprep.mubr.f32.mxu0 0.0
        %2280 = vmatmul.mubr.f32.gmra.mrb[0].mxu0 %v2180
        %v2281 = vpop.f32.mrb[0].mxu0
        %v2282 = vadd.f32 0.0, %v2281
        %v2283 = vpop.f32.mrb[0].mxu0
        %2284 = vmatprep.mubr.f32.mxu0 0.0
        %2285 = vmatmul.mubr.f32.gmra.mrb[0].mxu0 %v2183
        %v2286 = vpop.f32.mrb[0].mxu0
        %v2287 = vadd.f32 0.0, %v2286
        %v2288 = vpop.f32.mrb[0].mxu0
        %2289 = vdwg.mxu0
        %v2291 = vsel %vm895, %v1760, 0
        %v2294 = vsel %vm895, %v1762, 0
        %v2297 = vsel %vm895, %v1764, 0
        %v2300 = vsel %vm895, %v1766, 0
        %v2303 = vsel %vm895, %v1768, 0
        %v2306 = vsel %vm895, %v1770, 0
        %v2309 = vsel %vm895, %v1772, 0
        %v2312 = vsel %vm895, %v1774, 0
        %2314 = vmatprep.subr.mxu0 0.0
        %2315 = vmatpush1.msra.mxu0 %v827
        %2316 = vmatprep.subr.mxu0 0.0
        %2317 = vmatpush1.msra.mxu0 %v833
        %2318 = vmatprep.subr.mxu0 0.0
        %2319 = vmatpush1.msra.mxu0 %v839
        %2320 = vmatprep.subr.mxu0 0.0
        %2321 = vmatpush1.msra.mxu0 %v845
        %2322 = vmatprep.subr.mxu0 0.0
        %2323 = vmatpush1.msra.mxu0 %v851
        %2324 = vmatprep.subr.mxu0 0.0
        %2325 = vmatpush1.msra.mxu0 %v857
        %2326 = vmatprep.subr.mxu0 0.0
        %2327 = vmatpush1.msra.mxu0 %v863
        %2328 = vmatprep.subr.mxu0 0.0
        %2329 = vmatpush1.msra.mxu0 %v869
        %2330 = vmatprep.subr.mxu0 0.0
        %2331 = vmatpush1.msra.mxu0 0.0
        %2332 = vmatprep.subr.mxu0 0.0
        %2333 = vmatpush1.msra.mxu0 0.0
        %2334 = vmatprep.subr.mxu0 0.0
        %2335 = vmatpush1.msra.mxu0 0.0
        %2336 = vmatprep.subr.mxu0 0.0
        %2337 = vmatpush1.msra.mxu0 0.0
        %2338 = vmatprep.subr.mxu0 0.0
        %2339 = vmatpush1.msra.mxu0 0.0
        %2340 = vmatprep.subr.mxu0 0.0
        %2341 = vmatpush1.msra.mxu0 0.0
        %2342 = vmatprep.subr.mxu0 0.0
        %2343 = vmatpush1.msra.mxu0 0.0
        %2344 = vmatprep.subr.mxu0 0.0
        %2345 = vmatpush1.msra.mxu0 0.0
        %2346 = vmatprep.subr.mxu0 0.0
        %2347 = vmatpush1.msra.mxu0 0.0
        %2348 = vmatprep.subr.mxu0 0.0
        %2349 = vmatpush1.msra.mxu0 0.0
        %2350 = vmatprep.subr.mxu0 0.0
        %2351 = vmatpush1.msra.mxu0 0.0
        %2352 = vmatprep.subr.mxu0 0.0
        %2353 = vmatpush1.msra.mxu0 0.0
        %2354 = vmatprep.subr.mxu0 0.0
        %2355 = vmatpush1.msra.mxu0 0.0
        %2356 = vmatprep.subr.mxu0 0.0
        %2357 = vmatpush1.msra.mxu0 0.0
        %2358 = vmatprep.subr.mxu0 0.0
        %2359 = vmatpush1.msra.mxu0 0.0
        %2360 = vmatprep.subr.mxu0 0.0
        %2361 = vmatpush1.msra.mxu0 0.0
        %2362 = vmatprep.subr.mxu0 0.0
        %2363 = vmatpush1.msra.mxu0 0.0
        %2364 = vmatprep.subr.mxu0 0.0
        %2365 = vmatpush1.msra.mxu0 0.0
        %2366 = vmatprep.subr.mxu0 0.0
        %2367 = vmatpush1.msra.mxu0 0.0
        %2368 = vmatprep.subr.mxu0 0.0
        %2369 = vmatpush1.msra.mxu0 0.0
        %2370 = vmatprep.subr.mxu0 0.0
        %2371 = vmatpush1.msra.mxu0 0.0
        %2372 = vmatprep.subr.mxu0 0.0
        %2373 = vmatpush1.msra.mxu0 0.0
        %2374 = vmatprep.subr.mxu0 0.0
        %2375 = vmatpush1.msra.mxu0 0.0
        %2376 = vmatprep.subr.mxu0 0.0
        %2377 = vmatpush1.msra.mxu0 0.0
        %2378 = vmatprep.mubr.f32.mxu0 0.0
        %2379 = vmatmul.mubr.f32.gmra.mrb[0].mxu0 %v2291
        %v2380 = vpop.f32.mrb[0].mxu0
        %v2381 = vadd.f32 0.0, %v2380
        %v2382 = vpop.f32.mrb[0].mxu0
        %2383 = vmatprep.mubr.f32.mxu0 0.0
        %2384 = vmatmul.mubr.f32.gmra.mrb[0].mxu0 %v2294
        %v2385 = vpop.f32.mrb[0].mxu0
        %v2386 = vadd.f32 0.0, %v2385
        %v2387 = vpop.f32.mrb[0].mxu0
        %2388 = vmatprep.mubr.f32.mxu0 0.0
        %2389 = vmatmul.mubr.f32.gmra.mrb[0].mxu0 %v2297
        %v2390 = vpop.f32.mrb[0].mxu0
        %v2391 = vadd.f32 0.0, %v2390
        %v2392 = vpop.f32.mrb[0].mxu0
        %2393 = vmatprep.mubr.f32.mxu0 0.0
        %2394 = vmatmul.mubr.f32.gmra.mrb[0].mxu0 %v2300
        %v2395 = vpop.f32.mrb[0].mxu0
        %v2396 = vadd.f32 0.0, %v2395
        %v2397 = vpop.f32.mrb[0].mxu0
        %2398 = vmatprep.mubr.f32.mxu0 0.0
        %2399 = vmatmul.mubr.f32.gmra.mrb[0].mxu0 %v2303
        %v2400 = vpop.f32.mrb[0].mxu0
        %v2401 = vadd.f32 0.0, %v2400
        %v2402 = vpop.f32.mrb[0].mxu0
        %2403 = vmatprep.mubr.f32.mxu0 0.0
        %2404 = vmatmul.mubr.f32.gmra.mrb[0].mxu0 %v2306
        %v2405 = vpop.f32.mrb[0].mxu0
        %v2406 = vadd.f32 0.0, %v2405
        %v2407 = vpop.f32.mrb[0].mxu0
        %2408 = vmatprep.mubr.f32.mxu0 0.0
        %2409 = vmatmul.mubr.f32.gmra.mrb[0].mxu0 %v2309
        %v2410 = vpop.f32.mrb[0].mxu0
        %v2411 = vadd.f32 0.0, %v2410
        %v2412 = vpop.f32.mrb[0].mxu0
        %2413 = vmatprep.mubr.f32.mxu0 0.0
        %2414 = vmatmul.mubr.f32.gmra.mrb[0].mxu0 %v2312
        %v2415 = vpop.f32.mrb[0].mxu0
        %v2416 = vadd.f32 0.0, %v2415
        %v2417 = vpop.f32.mrb[0].mxu0
        %2418 = vdwg.mxu0
        %v2419 = vmul.f32 %v1994, %v1871
        %v2420 = vmul.f32 %v1999, %v1872
        %v2421 = vmul.f32 %v2004, %v1873
        %v2422 = vmul.f32 %v2009, %v1874
        %v2423 = vmul.f32 %v2014, %v1875
        %v2424 = vmul.f32 %v2019, %v1876
        %v2425 = vmul.f32 %v2024, %v1877
        %v2426 = vmul.f32 %v2029, %v1878
        %v2427 = vmul.f32 %v2123, %v1879
        %v2428 = vmul.f32 %v2128, %v1880
        %v2429 = vmul.f32 %v2133, %v1881
        %v2430 = vmul.f32 %v2138, %v1882
        %v2431 = vmul.f32 %v2143, %v1883
        %v2432 = vmul.f32 %v2148, %v1884
        %v2433 = vmul.f32 %v2153, %v1885
        %v2434 = vmul.f32 %v2158, %v1886
        %v2435 = vmul.f32 %v2252, %v1887
        %v2436 = vmul.f32 %v2257, %v1888
        %v2437 = vmul.f32 %v2262, %v1889
        %v2438 = vmul.f32 %v2267, %v1890
        %v2439 = vmul.f32 %v2272, %v1891
        %v2440 = vmul.f32 %v2277, %v1892
        %v2441 = vmul.f32 %v2282, %v1893
        %v2442 = vmul.f32 %v2287, %v1894
        %v2443 = vmul.f32 %v2381, %v1895
        %v2444 = vmul.f32 %v2386, %v1896
        %v2445 = vmul.f32 %v2391, %v1897
        %v2446 = vmul.f32 %v2396, %v1898
        %v2447 = vmul.f32 %v2401, %v1899
        %v2448 = vmul.f32 %v2406, %v1900
        %v2449 = vmul.f32 %v2411, %v1901
        %v2450 = vmul.f32 %v2416, %v1902
        %2451 = vst.msk [vmem:[%s162] sm:$0xff] %vm895, %v2419
        %2452 = vst.msk [vmem:[%s162 + $0x8] sm:$0xff] %vm895, %v2420
        %2453 = vst.msk [vmem:[%s162 + $0x10] sm:$0xff] %vm895, %v2421
        %2454 = vst.msk [vmem:[%s162 + $0x18] sm:$0xff] %vm895, %v2422
        %2455 = vst.msk [vmem:[%s162 + $0x20] sm:$0xff] %vm895, %v2423
        %2456 = vst.msk [vmem:[%s162 + $0x28] sm:$0xff] %vm895, %v2424
        %2457 = vst.msk [vmem:[%s162 + $0x30] sm:$0xff] %vm895, %v2425
        %2458 = vst.msk [vmem:[%s162 + $0x38] sm:$0xff] %vm895, %v2426
        %2459 = vst.msk [vmem:[%s162 + $0x40] sm:$0xff] %vm895, %v2427
        %2460 = vst.msk [vmem:[%s162 + $0x48] sm:$0xff] %vm895, %v2428
        %2461 = vst.msk [vmem:[%s162 + $0x50] sm:$0xff] %vm895, %v2429
        %2462 = vst.msk [vmem:[%s162 + $0x58] sm:$0xff] %vm895, %v2430
        %2463 = vst.msk [vmem:[%s162 + $0x60] sm:$0xff] %vm895, %v2431
        %2464 = vst.msk [vmem:[%s162 + $0x68] sm:$0xff] %vm895, %v2432
        %2465 = vst.msk [vmem:[%s162 + $0x70] sm:$0xff] %vm895, %v2433
        %2466 = vst.msk [vmem:[%s162 + $0x78] sm:$0xff] %vm895, %v2434
        %2467 = vst.msk [vmem:[%s162 + $0x80] sm:$0xff] %vm895, %v2435
        %2468 = vst.msk [vmem:[%s162 + $0x88] sm:$0xff] %vm895, %v2436
        %2469 = vst.msk [vmem:[%s162 + $0x90] sm:$0xff] %vm895, %v2437
        %2470 = vst.msk [vmem:[%s162 + $0x98] sm:$0xff] %vm895, %v2438
        %2471 = vst.msk [vmem:[%s162 + $0xa0] sm:$0xff] %vm895, %v2439
        %2472 = vst.msk [vmem:[%s162 + $0xa8] sm:$0xff] %vm895, %v2440
        %2473 = vst.msk [vmem:[%s162 + $0xb0] sm:$0xff] %vm895, %v2441
        %2474 = vst.msk [vmem:[%s162 + $0xb8] sm:$0xff] %vm895, %v2442
        %2475 = vst.msk [vmem:[%s162 + $0xc0] sm:$0xff] %vm895, %v2443
        %2476 = vst.msk [vmem:[%s162 + $0xc8] sm:$0xff] %vm895, %v2444
        %2477 = vst.msk [vmem:[%s162 + $0xd0] sm:$0xff] %vm895, %v2445
        %2478 = vst.msk [vmem:[%s162 + $0xd8] sm:$0xff] %vm895, %v2446
        %2479 = vst.msk [vmem:[%s162 + $0xe0] sm:$0xff] %vm895, %v2447
        %2480 = vst.msk [vmem:[%s162 + $0xe8] sm:$0xff] %vm895, %v2448
        %2481 = vst.msk [vmem:[%s162 + $0xf0] sm:$0xff] %vm895, %v2449
        %2482 = vst.msk [vmem:[%s162 + $0xf8] sm:$0xff] %vm895, %v2450
        %s2483 = sand.u32 %s74, 1
        %s2484 = scalar_lea.sflag [#allocation4], %s2483
        %s2485 = sand.u32 %s74, 1
        %s2486 = smul.addr %s2485, 256
        %s2487 = scalar_lea.vmem [#allocation5], %s2486
        // Predicated region
        $region33: #{tpu_custom_call.1} parent=27 // pred_check
          %p2488 = pneg %p84
        $region34: #{tpu_custom_call.1} parent=27 // pred_check_branch
          %2490 = sbr.rel (%p2488) target = $region36
        $region35: #{tpu_custom_call.1} parent=27 // pred_region
          %s2491 = smul.u32 4, %s19
          %s2493 = ssub.s32 4096, 4096
          %2494 = vsyncadd %s2484, %s2493
          %s2495 = smul.addr %s2491, 8
          %s2496 = smul.addr %s2495, 128
          %s2497 = scalar_lea.hbm %s2, %s2496
          %s2498 = sshll.u32 %s2487, 4
          %s2499 = int_to_ptr.vmem [resolvable:$true] %s2498
          %2504 = dma.vmem_to_hbm [thread:$0]  %s2499, 4096, %s2497, %s2484, 128, 128, 8
        $region36: #{tpu_custom_call.1} parent=27 // pred_fallthru
          _
      $region28: #{tpu_custom_call.1} parent=5 // pred_fallthru
        _
      %p2505 = scmp.le.s32.totalorder 2, %s14
      // Predicated region
      $region37: #{tpu_custom_call.1} parent=5 // pred_check
        %p2506 = pneg %p2505
      $region38: #{tpu_custom_call.1} parent=5 // pred_check_branch
        %2508 = sbr.rel (%p2506) target = $region40
      $region39: #{tpu_custom_call.1} parent=5 // pred_region
        %s2509 = ssub.s32 %s14, 2
        // Predicated region
        $region41: #{tpu_custom_call.1} parent=39 // pred_check
          %p2510 = pneg %p90
        $region42: #{tpu_custom_call.1} parent=39 // pred_check_branch
          %2512 = sbr.rel (%p2510) target = $region44
        $region43: #{tpu_custom_call.1} parent=39 // pred_region
          %s2513 = sand.u32 %s75, 1
          %s2514 = scalar_lea.sflag [#allocation4], %s2513
          %s2515 = sand.u32 %s75, 1
          %s2516 = smul.addr %s2515, 256
          %s2517 = scalar_lea.vmem [#allocation5], %s2516
          %2518 = dma.done %s2514, 4096
        $region44: #{tpu_custom_call.1} parent=39 // pred_fallthru
          _
      $region40: #{tpu_custom_call.1} parent=5 // pred_fallthru
        _
    $region6: #{tpu_custom_call.1} parent=1 // loop_footer
      %s18 = sadd.s32 1, %s14
    $region7: #{tpu_custom_call.1} parent=1 // loop_footer_branch
      %13 = sbr.rel target = $region3
    $region8: #{tpu_custom_call.1} parent=1 // loop_exit
      _
    %2519 = vsyncpa [#allocation3], 1
    %s2520 = scalar_lea.sflag [#allocation3], 1
    %2521 = vsyncpa %s2520, 1
    %2522 = vsyncpa [#allocation4], 1
    %s2523 = scalar_lea.sflag [#allocation4], 1
    %2524 = vsyncpa %s2523, 1

</llo_original>
